<compile_context>
chip_gen: v7x
topology: tpu7x:2x2x1
jax: 0.10.0
libtpu: 0.0.40
codegen_flags: <defaults>
</compile_context>

<pallas_src>
import math

import jax
import jax.numpy as jnp
from jax.experimental import pallas as pl
from jax.experimental.pallas import tpu as pltpu


# ---------------------------------------------------------------------------
# Helpers
# ---------------------------------------------------------------------------
def _round_up(x, m):
    return ((x + m - 1) // m) * m


def _buf_bytes(rows, cols, itemsize, sublane=8, lane=128):
    """VMEM bytes for one buffer of a (rows, cols) block incl. (8,128) tiling pad."""
    return _round_up(max(rows, 1), sublane) * _round_up(max(cols, 1), lane) * itemsize


def _pick_row_tile(n, requested, *, min_tiles=4, lane=128):
    """Largest power-of-two tile <= requested keeping >= min_tiles row tiles."""
    t = max(lane, requested)
    while t > lane and pl.cdiv(n, t) < min_tiles:
        t //= 2
    return t


# ---------------------------------------------------------------------------
# Kernel
# ---------------------------------------------------------------------------
def _make_kernel(we_resident, tk):
    def kernel(a_ref,        # (TM, TK) bf16  adjacency tile
               we_ref,       # (Np, Hp) bf16 resident  OR  (TK, Hp) bf16 streamed
               r_ref,        # (TM, Hp) f32  precomputed X-branch + biases
               w1p_ref,      # (Hp, Hp) bf16  (I + W1)
               wf_ref,       # (Hp, Cp) bf16
               bf_ref,       # (1, Cp) f32
               o_ref,        # (TM, Cp) f32
               acc_ref):     # VMEM scratch (TM, Hp) f32
        k = pl.program_id(1)

        @pl.when(k == 0)
        def _():
            acc_ref[...] = jnp.zeros_like(acc_ref)

        if we_resident:
            start = pl.multiple_of(k * tk, tk)
            we_tile = we_ref[pl.ds(start, tk), :]
        else:
            we_tile = we_ref[...]

        # SpMM partial sum: A[:, k-tile] @ W_e[k-tile, :]  (bf16 operands, f32 acc)
        acc_ref[...] += jnp.dot(a_ref[...], we_tile,
                                preferred_element_type=jnp.float32)

        @pl.when(k == pl.num_programs(1) - 1)
        def _():
            h_a = acc_ref[...].astype(jnp.bfloat16)                       # (TM, Hp)
            out = (jnp.dot(h_a, w1p_ref[...],
                           preferred_element_type=jnp.float32)
                   + r_ref[...])                                          # (TM, Hp) f32
            y = jnp.dot(jnp.maximum(out, 0.0).astype(jnp.bfloat16),
                        wf_ref[...],
                        preferred_element_type=jnp.float32) + bf_ref[...]
            o_ref[...] = y.astype(o_ref.dtype)

    return kernel


# ---------------------------------------------------------------------------
# Wrapper
# ---------------------------------------------------------------------------
def linkx_forward(a_dense, x, params, *, tm=512, tk=512):
    """a_dense: (N, N) f32 dense adjacency with A[dst, src] = edge_weight.
       x: (N, F) f32 node features.  Weights pre-transposed to (in, out).
       tm/tk: requested power-of-two tiles (multiples of 128); auto-clamped."""
    n = a_dense.shape[0]
    h = params["w1"].shape[0]
    c = params["wf"].shape[1]
    lane = 128
    f32, bf16 = jnp.float32, jnp.bfloat16

    tm = _pick_row_tile(n, tm)        # keep >= 4 row tiles on small graphs
    tk = min(tk, tm)
    n_p = _round_up(n, math.lcm(tm, tk))
    h_p = _round_up(h, lane)          # lane-dense hidden
    c_p = _round_up(c, lane)          # lane-dense output

    # Physical VMEM -> cap (v7x: 64 MiB per TC; v5e/v6e: 128 MiB). 25% headroom.
    try:
        phys_vmem = int(pltpu.get_tpu_info().vmem_capacity_bytes)
    except Exception:
        phys_vmem = 64 * 1024 * 1024  # conservative (works on every generation)
    vmem_cap = (phys_vmem * 3) // 4

    # --- one-time parameter fusion / precompute (plain XLA, outside kernel) ---
    eye = jnp.eye(h, dtype=f32)
    w1_full = eye + params["w1"]
    w2_full = eye + params["w2"]

    # X branch + all biases precomputed into R (removes lane-sparse (TM,F) matmul
    # and an (Hp,Hp) matmul from the per-row-tile tail).
    h_x = x.astype(f32) @ params["wn"] + params["bn"]
    r_core = h_x @ w2_full + (params["be"] @ w1_full + params["b1"] + params["b2"])
    r_p = jnp.zeros((n_p, h_p), f32).at[:n, :h].set(r_core)

    a_p = jnp.zeros((n_p, n_p), bf16).at[:n, :n].set(a_dense.astype(bf16))
    we_full = jnp.zeros((n_p, h_p), bf16).at[:n, :h].set(params["we"].astype(bf16))
    w1p = jnp.zeros((h_p, h_p), bf16).at[:h, :h].set(w1_full.astype(bf16))
    wf = jnp.zeros((h_p, c_p), bf16).at[:h, :c].set(params["wf"].astype(bf16))
    bf_p = jnp.zeros((1, c_p), f32).at[:, :c].set(params["bf"])

    # Keep W_e fully VMEM-resident when it fits comfortably; else stream k-tiles.
    we_resident = _buf_bytes(n_p, h_p, 2) <= max(vmem_cap // 3, 8 * 1024 * 1024)

    grid = (n_p // tm, n_p // tk)

    def _run(single_buffer_weights):
        const_kw = {}
        if single_buffer_weights and hasattr(pl, "Buffered"):
            const_kw = {"pipeline_mode": pl.Buffered(1)}
        n_wbuf = 1 if const_kw else 2

        def const_spec(shape):
            return pl.BlockSpec(shape, lambda i, k: (0, 0), **const_kw)

        if we_resident:
            we_spec = const_spec((n_p, h_p))
            we_bytes = n_wbuf * _buf_bytes(n_p, h_p, 2)
        else:
            we_spec = pl.BlockSpec((tk, h_p), lambda i, k: (k, 0))
            we_bytes = 2 * _buf_bytes(tk, h_p, 2)

        # VMEM budget, accounting for (8,128) tiling padding of every buffer.
        est = (2 * _buf_bytes(tm, tk, 2)             # A tile (double-buffered)
               + we_bytes                            # W_e
               + 2 * _buf_bytes(tm, h_p, 4)          # R row tile
               + n_wbuf * _buf_bytes(h_p, h_p, 2)    # W1'
               + n_wbuf * _buf_bytes(h_p, c_p, 2)    # W_f
               + n_wbuf * _buf_bytes(1, c_p, 4)      # b_f (pads to 8 sublanes)
               + 2 * _buf_bytes(tm, c_p, 4)          # output tile
               + _buf_bytes(tm, h_p, 4))             # accumulator scratch
        vmem_limit = min(max(int(1.25 * est), 16 * 1024 * 1024), vmem_cap)

        grid_spec = pltpu.PrefetchScalarGridSpec(
            num_scalar_prefetch=0,
            grid=grid,
            in_specs=[
                pl.BlockSpec((tm, tk), lambda i, k: (i, k)),    # A row/col tile
                we_spec,                                        # W_e
                pl.BlockSpec((tm, h_p), lambda i, k: (i, 0)),   # R row tile
                const_spec((h_p, h_p)),                         # W1' (resident)
                const_spec((h_p, c_p)),                         # W_f (resident)
                const_spec((1, c_p)),                           # b_f
            ],
            out_specs=pl.BlockSpec((tm, c_p), lambda i, k: (i, 0)),
            scratch_shapes=[pltpu.VMEM((tm, h_p), jnp.float32)],
        )

        return pl.pallas_call(
            _make_kernel(we_resident, tk),
            out_shape=jax.ShapeDtypeStruct((n_p, c_p), jnp.float32),
            grid_spec=grid_spec,
            compiler_params=pltpu.CompilerParams(
                dimension_semantics=("parallel", "arbitrary"),
                vmem_limit_bytes=vmem_limit),
        )(a_p, we_full, r_p, w1p, wf, bf_p)

    try:
        y_pad = jax.block_until_ready(_run(True))
    except Exception:
        # pipeline_mode=pl.Buffered(1) unsupported here -> default double buffers.
        y_pad = jax.block_until_ready(_run(False))

    return y_pad[:n, :c]


# ---------------------------------------------------------------------------
# Glue: dense adjacency from edge_index (PyG flow='source_to_target', aggr=add)
# ---------------------------------------------------------------------------
def build_dense_adjacency(edge_index, edge_weight, num_nodes):
    src, dst = edge_index[0], edge_index[1]
    a = jnp.zeros((num_nodes, num_nodes), jnp.float32)
    return a.at[dst, src].add(edge_weight)


def init_params(key, num_nodes, in_channels, hidden, out_channels):
    ks = jax.random.split(key, 10)

    def unif(k, shape, scale):
        return jax.random.uniform(k, shape, jnp.float32, -scale, scale)

    return {
        # SparseLinear.weight (num_nodes, hidden) + bias
        "we": unif(ks[0], (num_nodes, hidden), math.sqrt(3.0 / num_nodes)),
        "be": unif(ks[1], (1, hidden), 1.0 / math.sqrt(num_nodes)),
        # cat_lin1 (hidden -> hidden), stored transposed (in, out)
        "w1": unif(ks[2], (hidden, hidden), 1.0 / math.sqrt(hidden)),
        "b1": unif(ks[3], (1, hidden), 1.0 / math.sqrt(hidden)),
        # node_mlp single Linear (in_channels -> hidden)
        "wn": unif(ks[4], (in_channels, hidden), 1.0 / math.sqrt(in_channels)),
        "bn": unif(ks[5], (1, hidden), 1.0 / math.sqrt(in_channels)),
        # cat_lin2 (hidden -> hidden)
        "w2": unif(ks[6], (hidden, hidden), 1.0 / math.sqrt(hidden)),
        "b2": unif(ks[7], (1, hidden), 1.0 / math.sqrt(hidden)),
        # final_mlp single Linear (hidden -> out)
        "wf": unif(ks[8], (hidden, out_channels), 1.0 / math.sqrt(hidden)),
        "bf": unif(ks[9], (1, out_channels), 1.0 / math.sqrt(hidden)),
    }


def linkx_reference(a_dense, x, p):
    h_a = a_dense @ p["we"] + p["be"]
    out = h_a + (h_a @ p["w1"] + p["b1"])
    h_x = x @ p["wn"] + p["bn"]
    out = out + h_x + (h_x @ p["w2"] + p["b2"])
    return jnp.maximum(out, 0.0) @ p["wf"] + p["bf"]


if __name__ == "__main__":
    # num_nodes, in_channels, hidden, out_channels, num_edges
    N, F, H, C, E = 300, 16, 32, 8, 1200

    key = jax.random.PRNGKey(0)
    k_x, k_src, k_dst, k_w, k_p = jax.random.split(key, 5)

    x = jax.random.normal(k_x, (N, F), jnp.float32)
    src = jax.random.randint(k_src, (E,), 0, N)
    dst = jax.random.randint(k_dst, (E,), 0, N)
    edge_index = jnp.stack([src, dst], axis=0)               # (2, E)
    edge_weight = jax.random.uniform(k_w, (E,), jnp.float32, 0.5, 1.5)

    params = init_params(k_p, N, F, H, C)
    a_dense = build_dense_adjacency(edge_index, edge_weight, N)

    y = linkx_forward(a_dense, x, params)                    # tm/tk auto-clamped
    y = jax.block_until_ready(y)

    y_ref = linkx_reference(a_dense, x, params)
    assert y.shape == (N, C), y.shape
    # bf16 MXU operands (A, W_e, I+W1, W_f) with f32 accumulation -> loose tol
    assert jnp.allclose(y, y_ref, rtol=2e-2, atol=2e-2), "mismatch vs reference"

    print("KERNEL_OK")
</pallas_src>

<mosaic_0001>
module attributes {stable_mosaic.version = 11 : i64} {
  func.func @kernel(%arg0: i32, %arg1: i32, %arg2: memref<128x128xbf16, #tpu.memory_space<vmem>>, %arg3: memref<384x128xbf16, #tpu.memory_space<vmem>>, %arg4: memref<128x128xf32, #tpu.memory_space<vmem>>, %arg5: memref<128x128xbf16, #tpu.memory_space<vmem>>, %arg6: memref<128x128xbf16, #tpu.memory_space<vmem>>, %arg7: memref<1x128xf32, #tpu.memory_space<vmem>>, %arg8: memref<128x128xf32, #tpu.memory_space<vmem>>, %arg9: memref<128x128xf32, #tpu.memory_space<vmem>>) attributes {dimension_semantics = [#tpu.dimension_semantics<parallel>, #tpu.dimension_semantics<arbitrary>], iteration_bounds = array<i64: 3, 3>, scalar_prefetch = 0 : i64, scratch_operands = 1 : i64, tpu.core_type = #tpu.core_type<tc>, window_params = [{transform_indices = @transform_0, window_bounds = array<i64: 128, 128>}, {pipeline_mode = #tpu.pipeline_mode<synchronous>, transform_indices = @transform_1, window_bounds = array<i64: 384, 128>}, {transform_indices = @transform_2, window_bounds = array<i64: 128, 128>}, {pipeline_mode = #tpu.pipeline_mode<synchronous>, transform_indices = @transform_3, window_bounds = array<i64: 128, 128>}, {pipeline_mode = #tpu.pipeline_mode<synchronous>, transform_indices = @transform_4, window_bounds = array<i64: 128, 128>}, {pipeline_mode = #tpu.pipeline_mode<synchronous>, transform_indices = @transform_5, window_bounds = array<i64: 1, 128>}, {transform_indices = @transform_6, window_bounds = array<i64: 128, 128>}]} {
    %c0_i32 = arith.constant 0 : i32
    %0 = arith.cmpi eq, %arg1, %c0_i32 : i32
    %1 = arith.extui %0 : i1 to i32
    %c0_i32_0 = arith.constant 0 : i32
    %2 = arith.cmpi ne, %1, %c0_i32_0 : i32
    scf.if %2 {
      %cst_8 = arith.constant 0.000000e+00 : f32
      %15 = vector.broadcast %cst_8 : f32 to vector<128x128xf32>
      %c0_9 = arith.constant 0 : index
      %c0_10 = arith.constant 0 : index
      %16 = vector.load %arg9[%c0_9, %c0_10] : memref<128x128xf32, #tpu.memory_space<vmem>>, vector<128x128xf32>
      tpu.vector_store %arg9[%c0_9, %c0_10], %15 {strides = array<i32>} : memref<128x128xf32, #tpu.memory_space<vmem>>, vector<128x128xf32>,
    } else {
    }
    %c128_i32 = arith.constant 128 : i32
    %3 = arith.muli %arg1, %c128_i32 : i32
    %4 = tpu.assume_multiple %3, 128 : i32
    %5 = arith.index_cast %4 : i32 to index
    %c0 = arith.constant 0 : index
    %6 = vector.load %arg3[%5, %c0] : memref<384x128xbf16, #tpu.memory_space<vmem>>, vector<128x128xbf16>
    %c0_1 = arith.constant 0 : index
    %c0_2 = arith.constant 0 : index
    %7 = vector.load %arg9[%c0_1, %c0_2] : memref<128x128xf32, #tpu.memory_space<vmem>>, vector<128x128xf32>
    %c0_3 = arith.constant 0 : index
    %c0_4 = arith.constant 0 : index
    %8 = vector.load %arg2[%c0_3, %c0_4] : memref<128x128xbf16, #tpu.memory_space<vmem>>, vector<128x128xbf16>
    %cst = arith.constant dense<0.000000e+00> : vector<128x128xf32>
    %9 = tpu.matmul %8, %6, %cst {dimension_numbers = #tpu.dot_dimension_numbers<[1], [0], [0], [1], [0, 0, 1, 1], [], []>} : vector<128x128xbf16>, vector<128x128xbf16>, vector<128x128xf32> -> vector<128x128xf32>
    %10 = arith.addf %7, %9 : vector<128x128xf32>
    %c0_5 = arith.constant 0 : index
    %c0_6 = arith.constant 0 : index
    %11 = vector.load %arg9[%c0_5, %c0_6] : memref<128x128xf32, #tpu.memory_space<vmem>>, vector<128x128xf32>
    tpu.vector_store %arg9[%c0_5, %c0_6], %10 {strides = array<i32>} : memref<128x128xf32, #tpu.memory_space<vmem>>, vector<128x128xf32>,
    %c2_i32 = arith.constant 2 : i32
    %12 = arith.cmpi eq, %arg1, %c2_i32 : i32
    %13 = arith.extui %12 : i1 to i32
    %c0_i32_7 = arith.constant 0 : i32
    %14 = arith.cmpi ne, %13, %c0_i32_7 : i32
    scf.if %14 {
      %c0_8 = arith.constant 0 : index
      %c0_9 = arith.constant 0 : index
      %15 = vector.load %arg9[%c0_8, %c0_9] : memref<128x128xf32, #tpu.memory_space<vmem>>, vector<128x128xf32>
      %16 = arith.truncf %15 : vector<128x128xf32> to vector<128x128xbf16>
      %c0_10 = arith.constant 0 : index
      %c0_11 = arith.constant 0 : index
      %17 = vector.load %arg5[%c0_10, %c0_11] : memref<128x128xbf16, #tpu.memory_space<vmem>>, vector<128x128xbf16>
      %cst_12 = arith.constant dense<0.000000e+00> : vector<128x128xf32>
      %18 = tpu.matmul %16, %17, %cst_12 {dimension_numbers = #tpu.dot_dimension_numbers<[1], [0], [0], [1], [0, 0, 1, 1], [], []>} : vector<128x128xbf16>, vector<128x128xbf16>, vector<128x128xf32> -> vector<128x128xf32>
      %c0_13 = arith.constant 0 : index
      %c0_14 = arith.constant 0 : index
      %19 = vector.load %arg4[%c0_13, %c0_14] : memref<128x128xf32, #tpu.memory_space<vmem>>, vector<128x128xf32>
      %20 = arith.addf %18, %19 : vector<128x128xf32>
      %cst_15 = arith.constant 0.000000e+00 : f32
      %21 = vector.broadcast %cst_15 : f32 to vector<128x128xf32>
      %22 = arith.maximumf %20, %21 : vector<128x128xf32>
      %23 = arith.truncf %22 : vector<128x128xf32> to vector<128x128xbf16>
      %c0_16 = arith.constant 0 : index
      %c0_17 = arith.constant 0 : index
      %24 = vector.load %arg6[%c0_16, %c0_17] : memref<128x128xbf16, #tpu.memory_space<vmem>>, vector<128x128xbf16>
      %cst_18 = arith.constant dense<0.000000e+00> : vector<128x128xf32>
      %25 = tpu.matmul %23, %24, %cst_18 {dimension_numbers = #tpu.dot_dimension_numbers<[1], [0], [0], [1], [0, 0, 1, 1], [], []>} : vector<128x128xbf16>, vector<128x128xbf16>, vector<128x128xf32> -> vector<128x128xf32>
      %c0_19 = arith.constant 0 : index
      %c0_20 = arith.constant 0 : index
      %26 = vector.load %arg7[%c0_19, %c0_20] : memref<1x128xf32, #tpu.memory_space<vmem>>, vector<1x128xf32>
      %27 = vector.broadcast %26 : vector<1x128xf32> to vector<128x128xf32>
      %28 = arith.addf %25, %27 : vector<128x128xf32>
      %c0_21 = arith.constant 0 : index
      %c0_22 = arith.constant 0 : index
      %29 = vector.load %arg8[%c0_21, %c0_22] : memref<128x128xf32, #tpu.memory_space<vmem>>, vector<128x128xf32>
      tpu.vector_store %arg8[%c0_21, %c0_22], %28 {strides = array<i32>} : memref<128x128xf32, #tpu.memory_space<vmem>>, vector<128x128xf32>,
    } else {
    }
    return
  }
  func.func @transform_0(%arg0: i32, %arg1: i32) -> (i32, i32) {
    %c0_i32 = arith.constant 0 : i32
    return %arg0, %arg1 : i32, i32
  }
  func.func @transform_1(%arg0: i32, %arg1: i32) -> (i32, i32) {
    %c0_i32 = arith.constant 0 : i32
    %c0_i32_0 = arith.constant 0 : i32
    %c0_i32_1 = arith.constant 0 : i32
    return %c0_i32, %c0_i32_0 : i32, i32
  }
  func.func @transform_2(%arg0: i32, %arg1: i32) -> (i32, i32) {
    %c0_i32 = arith.constant 0 : i32
    %c0_i32_0 = arith.constant 0 : i32
    return %arg0, %c0_i32 : i32, i32
  }
  func.func @transform_3(%arg0: i32, %arg1: i32) -> (i32, i32) {
    %c0_i32 = arith.constant 0 : i32
    %c0_i32_0 = arith.constant 0 : i32
    %c0_i32_1 = arith.constant 0 : i32
    return %c0_i32, %c0_i32_0 : i32, i32
  }
  func.func @transform_4(%arg0: i32, %arg1: i32) -> (i32, i32) {
    %c0_i32 = arith.constant 0 : i32
    %c0_i32_0 = arith.constant 0 : i32
    %c0_i32_1 = arith.constant 0 : i32
    return %c0_i32, %c0_i32_0 : i32, i32
  }
  func.func @transform_5(%arg0: i32, %arg1: i32) -> (i32, i32) {
    %c0_i32 = arith.constant 0 : i32
    %c0_i32_0 = arith.constant 0 : i32
    %c0_i32_1 = arith.constant 0 : i32
    return %c0_i32, %c0_i32_0 : i32, i32
  }
  func.func @transform_6(%arg0: i32, %arg1: i32) -> (i32, i32) {
    %c0_i32 = arith.constant 0 : i32
    %c0_i32_0 = arith.constant 0 : i32
    return %arg0, %c0_i32 : i32, i32
  }
}

module attributes {stable_mosaic.version = 11 : i64} {
  func.func @kernel(%arg0: i32, %arg1: i32, %arg2: memref<128x128xbf16, #tpu.memory_space<vmem>>, %arg3: memref<384x128xbf16, #tpu.memory_space<vmem>>, %arg4: memref<128x128xf32, #tpu.memory_space<vmem>>, %arg5: memref<128x128xbf16, #tpu.memory_space<vmem>>, %arg6: memref<128x128xbf16, #tpu.memory_space<vmem>>, %arg7: memref<1x128xf32, #tpu.memory_space<vmem>>, %arg8: memref<128x128xf32, #tpu.memory_space<vmem>>, %arg9: memref<128x128xf32, #tpu.memory_space<vmem>>) attributes {dimension_semantics = [#tpu.dimension_semantics<parallel>, #tpu.dimension_semantics<arbitrary>], iteration_bounds = array<i64: 3, 3>, scalar_prefetch = 0 : i64, scratch_operands = 1 : i64, tpu.core_type = #tpu.core_type<tc>, window_params = [{transform_indices = @transform_0, window_bounds = array<i64: 128, 128>}, {pipeline_mode = #tpu.pipeline_mode<synchronous>, transform_indices = @transform_1, window_bounds = array<i64: 384, 128>}, {transform_indices = @transform_2, window_bounds = array<i64: 128, 128>}, {pipeline_mode = #tpu.pipeline_mode<synchronous>, transform_indices = @transform_3, window_bounds = array<i64: 128, 128>}, {pipeline_mode = #tpu.pipeline_mode<synchronous>, transform_indices = @transform_4, window_bounds = array<i64: 128, 128>}, {pipeline_mode = #tpu.pipeline_mode<synchronous>, transform_indices = @transform_5, window_bounds = array<i64: 1, 128>}, {transform_indices = @transform_6, window_bounds = array<i64: 128, 128>}]} {
    %c0_i32 = arith.constant 0 : i32
    %0 = arith.cmpi eq, %arg1, %c0_i32 : i32
    %1 = arith.extui %0 : i1 to i32
    %c0_i32_0 = arith.constant 0 : i32
    %2 = arith.cmpi ne, %1, %c0_i32_0 : i32
    scf.if %2 {
      %cst_8 = arith.constant 0.000000e+00 : f32
      %15 = vector.broadcast %cst_8 : f32 to vector<128x128xf32>
      %c0_9 = arith.constant 0 : index
      %c0_10 = arith.constant 0 : index
      %16 = vector.load %arg9[%c0_9, %c0_10] : memref<128x128xf32, #tpu.memory_space<vmem>>, vector<128x128xf32>
      tpu.vector_store %arg9[%c0_9, %c0_10], %15 {strides = array<i32>} : memref<128x128xf32, #tpu.memory_space<vmem>>, vector<128x128xf32>,
    } else {
    }
    %c128_i32 = arith.constant 128 : i32
    %3 = arith.muli %arg1, %c128_i32 : i32
    %4 = tpu.assume_multiple %3, 128 : i32
    %5 = arith.index_cast %4 : i32 to index
    %c0 = arith.constant 0 : index
    %6 = vector.load %arg3[%5, %c0] : memref<384x128xbf16, #tpu.memory_space<vmem>>, vector<128x128xbf16>
    %c0_1 = arith.constant 0 : index
    %c0_2 = arith.constant 0 : index
    %7 = vector.load %arg9[%c0_1, %c0_2] : memref<128x128xf32, #tpu.memory_space<vmem>>, vector<128x128xf32>
    %c0_3 = arith.constant 0 : index
    %c0_4 = arith.constant 0 : index
    %8 = vector.load %arg2[%c0_3, %c0_4] : memref<128x128xbf16, #tpu.memory_space<vmem>>, vector<128x128xbf16>
    %cst = arith.constant dense<0.000000e+00> : vector<128x128xf32>
    %9 = tpu.matmul %8, %6, %cst {dimension_numbers = #tpu.dot_dimension_numbers<[1], [0], [0], [1], [0, 0, 1, 1], [], []>} : vector<128x128xbf16>, vector<128x128xbf16>, vector<128x128xf32> -> vector<128x128xf32>
    %10 = arith.addf %7, %9 : vector<128x128xf32>
    %c0_5 = arith.constant 0 : index
    %c0_6 = arith.constant 0 : index
    %11 = vector.load %arg9[%c0_5, %c0_6] : memref<128x128xf32, #tpu.memory_space<vmem>>, vector<128x128xf32>
    tpu.vector_store %arg9[%c0_5, %c0_6], %10 {strides = array<i32>} : memref<128x128xf32, #tpu.memory_space<vmem>>, vector<128x128xf32>,
    %c2_i32 = arith.constant 2 : i32
    %12 = arith.cmpi eq, %arg1, %c2_i32 : i32
    %13 = arith.extui %12 : i1 to i32
    %c0_i32_7 = arith.constant 0 : i32
    %14 = arith.cmpi ne, %13, %c0_i32_7 : i32
    scf.if %14 {
      %c0_8 = arith.constant 0 : index
      %c0_9 = arith.constant 0 : index
      %15 = vector.load %arg9[%c0_8, %c0_9] : memref<128x128xf32, #tpu.memory_space<vmem>>, vector<128x128xf32>
      %16 = arith.truncf %15 : vector<128x128xf32> to vector<128x128xbf16>
      %c0_10 = arith.constant 0 : index
      %c0_11 = arith.constant 0 : index
      %17 = vector.load %arg5[%c0_10, %c0_11] : memref<128x128xbf16, #tpu.memory_space<vmem>>, vector<128x128xbf16>
      %cst_12 = arith.constant dense<0.000000e+00> : vector<128x128xf32>
      %18 = tpu.matmul %16, %17, %cst_12 {dimension_numbers = #tpu.dot_dimension_numbers<[1], [0], [0], [1], [0, 0, 1, 1], [], []>} : vector<128x128xbf16>, vector<128x128xbf16>, vector<128x128xf32> -> vector<128x128xf32>
      %c0_13 = arith.constant 0 : index
      %c0_14 = arith.constant 0 : index
      %19 = vector.load %arg4[%c0_13, %c0_14] : memref<128x128xf32, #tpu.memory_space<vmem>>, vector<128x128xf32>
      %20 = arith.addf %18, %19 : vector<128x128xf32>
      %cst_15 = arith.constant 0.000000e+00 : f32
      %21 = vector.broadcast %cst_15 : f32 to vector<128x128xf32>
      %22 = arith.maximumf %20, %21 : vector<128x128xf32>
      %23 = arith.truncf %22 : vector<128x128xf32> to vector<128x128xbf16>
      %c0_16 = arith.constant 0 : index
      %c0_17 = arith.constant 0 : index
      %24 = vector.load %arg6[%c0_16, %c0_17] : memref<128x128xbf16, #tpu.memory_space<vmem>>, vector<128x128xbf16>
      %cst_18 = arith.constant dense<0.000000e+00> : vector<128x128xf32>
      %25 = tpu.matmul %23, %24, %cst_18 {dimension_numbers = #tpu.dot_dimension_numbers<[1], [0], [0], [1], [0, 0, 1, 1], [], []>} : vector<128x128xbf16>, vector<128x128xbf16>, vector<128x128xf32> -> vector<128x128xf32>
      %c0_19 = arith.constant 0 : index
      %c0_20 = arith.constant 0 : index
      %26 = vector.load %arg7[%c0_19, %c0_20] : memref<1x128xf32, #tpu.memory_space<vmem>>, vector<1x128xf32>
      %27 = vector.broadcast %26 : vector<1x128xf32> to vector<128x128xf32>
      %28 = arith.addf %25, %27 : vector<128x128xf32>
      %c0_21 = arith.constant 0 : index
      %c0_22 = arith.constant 0 : index
      %29 = vector.load %arg8[%c0_21, %c0_22] : memref<128x128xf32, #tpu.memory_space<vmem>>, vector<128x128xf32>
      tpu.vector_store %arg8[%c0_21, %c0_22], %28 {strides = array<i32>} : memref<128x128xf32, #tpu.memory_space<vmem>>, vector<128x128xf32>,
    } else {
    }
    return
  }
  func.func @transform_0(%arg0: i32, %arg1: i32) -> (i32, i32) {
    %c0_i32 = arith.constant 0 : i32
    return %arg0, %arg1 : i32, i32
  }
  func.func @transform_1(%arg0: i32, %arg1: i32) -> (i32, i32) {
    %c0_i32 = arith.constant 0 : i32
    %c0_i32_0 = arith.constant 0 : i32
    %c0_i32_1 = arith.constant 0 : i32
    return %c0_i32, %c0_i32_0 : i32, i32
  }
  func.func @transform_2(%arg0: i32, %arg1: i32) -> (i32, i32) {
    %c0_i32 = arith.constant 0 : i32
    %c0_i32_0 = arith.constant 0 : i32
    return %arg0, %c0_i32 : i32, i32
  }
  func.func @transform_3(%arg0: i32, %arg1: i32) -> (i32, i32) {
    %c0_i32 = arith.constant 0 : i32
    %c0_i32_0 = arith.constant 0 : i32
    %c0_i32_1 = arith.constant 0 : i32
    return %c0_i32, %c0_i32_0 : i32, i32
  }
  func.func @transform_4(%arg0: i32, %arg1: i32) -> (i32, i32) {
    %c0_i32 = arith.constant 0 : i32
    %c0_i32_0 = arith.constant 0 : i32
    %c0_i32_1 = arith.constant 0 : i32
    return %c0_i32, %c0_i32_0 : i32, i32
  }
  func.func @transform_5(%arg0: i32, %arg1: i32) -> (i32, i32) {
    %c0_i32 = arith.constant 0 : i32
    %c0_i32_0 = arith.constant 0 : i32
    %c0_i32_1 = arith.constant 0 : i32
    return %c0_i32, %c0_i32_0 : i32, i32
  }
  func.func @transform_6(%arg0: i32, %arg1: i32) -> (i32, i32) {
    %c0_i32 = arith.constant 0 : i32
    %c0_i32_0 = arith.constant 0 : i32
    return %arg0, %c0_i32 : i32, i32
  }
}

</mosaic_0001>

<llo_original>
// kernel: tpu_custom_call.1
$region0: #{tpu_custom_call.1}
  #allocation0 [shape = 'u32[]', space=smem, size = 0x4, offset = 0x4, fixed_abs, tag = 'smem constant byte address 0x4 - core index']
  #allocation1 [shape = 'u32[144,128]{1,0:T(1,128)}', space=vmem, size = 0x12000, scoped, tag = 'internal scratch']
  #allocation2 [shape = 'f32[128,128]{1,0:T(8,128)}', space=vmem, size = 0x10000, scoped, tag = 'scratch operand']
  %s0 = inlined_call_operand.hbm [shape: bf16[384,384], index: 0, kind: input, shape index: {}]
  %s1 = inlined_call_operand.hbm [shape: bf16[384,128], index: 1, kind: input, shape index: {}]
  %s2 = inlined_call_operand.hbm [shape: f32[384,128], index: 2, kind: input, shape index: {}]
  %s3 = inlined_call_operand.hbm [shape: bf16[128,128], index: 3, kind: input, shape index: {}]
  %s4 = inlined_call_operand.hbm [shape: bf16[128,128], index: 4, kind: input, shape index: {}]
  %s5 = inlined_call_operand.vmem [shape: f32[1,128], index: 5, kind: input, shape index: {}]
  %s6 = inlined_call_operand.hbm [shape: f32[384,128], index: 6, kind: output, shape index: {}]
  %s7 = sld [smem:[#allocation0]]
  $region85: #{tpu_custom_call.1} parent=0
    _
  %s9 = ssub.s32 1, %s7
  %s10 = scalar_select 0, %s9, %s7
  $region1: #{tpu_custom_call.1} parent=0
    #allocation3 [shape = 'u8[65536]{0}', space=vmem, size = 0x10000, scoped, tag = 'input window, operand 0']
    #allocation4 [shape = 's32[2]{0}', space=sflag, size = 0x8, scoped, tag = 'scoped memory for tpu_custom_call.1']
    #allocation5 [shape = 's32[2]{0}', space=sflag, size = 0x8, scoped, tag = 'scoped memory for tpu_custom_call.1']
    #allocation6 [shape = 'u8[98304]{0}', space=vmem, size = 0x18000, scoped, tag = 'input window, operand 1, single buffered']
    #allocation7 [shape = 's32[1]{0}', space=sflag, size = 0x4, scoped, tag = 'scoped memory for tpu_custom_call.1']
    #allocation8 [shape = 'u8[131072]{0}', space=vmem, size = 0x20000, scoped, tag = 'input window, operand 2']
    #allocation9 [shape = 'u8[32768]{0}', space=vmem, size = 0x8000, scoped, tag = 'input window, operand 3, single buffered']
    #allocation10 [shape = 'u8[32768]{0}', space=vmem, size = 0x8000, scoped, tag = 'input window, operand 4, single buffered']
    #allocation11 [shape = 's32[1]{0}', space=sflag, size = 0x4, scoped, tag = 'scoped memory for tpu_custom_call.1']
    #allocation12 [shape = 'u8[131072]{0}', space=vmem, size = 0x20000, scoped, tag = 'output window, operand 0']
    %11 = vsyncpa [#allocation4], 0
    %s12 = scalar_lea.sflag [#allocation4], 1
    %13 = vsyncpa %s12, 0
    %14 = vsyncpa [#allocation7], 0
    %15 = vsyncpa [#allocation11], 0
    %16 = vsyncpa [#allocation5], 0
    %s17 = scalar_lea.sflag [#allocation5], 1
    %18 = vsyncpa %s17, 0
    loop: start=0, step=1, limit=11
    $region2: #{tpu_custom_call.1} parent=1 // loop_pre_header
      _
    $region3: #{tpu_custom_call.1} parent=1 // loop_header
      %s20 = sphi 0, %s24
      %p21 = scmp.ge.s32.totalorder %s20, 11
      %s27 = sphi 0, %s39
      %s28 = sphi 0, %s35
      %s29 = sphi 0, %s27
      %s30 = sphi 0, %s28
      %s31 = sphi 0, %s29
      %s32 = sphi 0, %s30
      %s44 = sphi 0, %s46
      %s47 = sphi 0, %s44
      %s48 = sphi 0, %s47
      %s64 = sphi 0, %s48
      %s68 = sphi 0, %s68
      %s70 = sphi 0, %s68
      %s71 = sphi 0, %s70
      %s85 = sphi 0, %s71
      %s91 = sphi 0, %s93
      %s94 = sphi 0, %s91
      %s95 = sphi 0, %s94
      %s111 = sphi 0, %s95
      %s115 = sphi 0, %s115
      %s117 = sphi 0, %s115
      %s118 = sphi 0, %s117
      %s132 = sphi 0, %s118
      %s136 = sphi 0, %s136
      %s138 = sphi 0, %s136
      %s139 = sphi 0, %s138
      %s153 = sphi 0, %s139
      %s157 = sphi 0, %s157
      %s159 = sphi 0, %s157
      %s160 = sphi 0, %s159
      %s174 = sphi 0, %s160
      %s180 = sphi 0, %s182
      %s183 = sphi 0, %s180
      %s184 = sphi 0, %s183
      %s200 = sphi 0, %s184
    $region4: #{tpu_custom_call.1} parent=1 // loop_header_branch
      %23 = sbr.rel (%p21) target = $region8
    $region5: #{tpu_custom_call.1} parent=1 // loop_body
      %s25 = ssub.s32 %s20, 1
      %s26 = ssub.s32 %s20, 2
      %s33 = sadd.s32 1, %s28
      %p34 = scmp.ge.s32.totalorder %s33, 3
      %s35 = scalar_select %p34, 0, %s33
      %s36 = sadd.s32 1, %s27
      %s37 = scalar_select %p34, %s36, %s27
      %p38 = scmp.ge.s32.totalorder %s37, 3
      %s39 = scalar_select %p38, 0, %s37
      %s40 = ssub.s32 %s27, %s39
      %s41 = ssub.s32 %s28, %s35
      %s42 = sor.u32 %s40, %s41
      %p43 = scmp.eq.s32.totalorder %s42, 0
      %s45 = sadd.s32 %s44, 1
      %s46 = scalar_select %p43, %s44, %s45
      %p49 = pneg %p43
      %p50 = scmp.eq.s32.totalorder %s20, 8
      %p51 = por %p49, %p50
      %p52 = scmp.ne.s32.totalorder %s44, %s47
      %p53 = scmp.eq.s32.totalorder %s20, 0
      %p54 = por %p52, %p53
      %p55 = scmp.ne.s32.totalorder %s44, %s47
      %p56 = scmp.eq.s32.totalorder %s25, 8
      %p57 = por %p55, %p56
      %p58 = scmp.ne.s32.totalorder %s47, %s48
      %p59 = scmp.eq.s32.totalorder %s25, 0
      %p60 = por %p58, %p59
      %p61 = scmp.ne.s32.totalorder %s47, %s48
      %p62 = scmp.eq.s32.totalorder %s26, 8
      %p63 = por %p61, %p62
      %p65 = scmp.ne.s32.totalorder %s48, %s64
      %p66 = scmp.eq.s32.totalorder %s26, 0
      %p67 = por %p65, %p66
      %s69 = sadd.s32 %s68, 1
      %p72 = scmp.eq.s32.totalorder %s20, 8
      %p73 = scmp.ne.s32.totalorder %s68, %s70
      %p74 = scmp.eq.s32.totalorder %s20, 0
      %p75 = por %p73, %p74
      %p76 = scmp.ne.s32.totalorder %s68, %s70
      %p77 = scmp.eq.s32.totalorder %s25, 8
      %p78 = por %p76, %p77
      %p79 = scmp.ne.s32.totalorder %s70, %s71
      %p80 = scmp.eq.s32.totalorder %s25, 0
      %p81 = por %p79, %p80
      %p82 = scmp.ne.s32.totalorder %s70, %s71
      %p83 = scmp.eq.s32.totalorder %s26, 8
      %p84 = por %p82, %p83
      %p86 = scmp.ne.s32.totalorder %s71, %s85
      %p87 = scmp.eq.s32.totalorder %s26, 0
      %p88 = por %p86, %p87
      %s89 = ssub.s32 %s27, %s39
      %p90 = scmp.eq.s32.totalorder %s89, 0
      %s92 = sadd.s32 %s91, 1
      %s93 = scalar_select %p90, %s91, %s92
      %p96 = pneg %p90
      %p97 = scmp.eq.s32.totalorder %s20, 8
      %p98 = por %p96, %p97
      %p99 = scmp.ne.s32.totalorder %s91, %s94
      %p100 = scmp.eq.s32.totalorder %s20, 0
      %p101 = por %p99, %p100
      %p102 = scmp.ne.s32.totalorder %s91, %s94
      %p103 = scmp.eq.s32.totalorder %s25, 8
      %p104 = por %p102, %p103
      %p105 = scmp.ne.s32.totalorder %s94, %s95
      %p106 = scmp.eq.s32.totalorder %s25, 0
      %p107 = por %p105, %p106
      %p108 = scmp.ne.s32.totalorder %s94, %s95
      %p109 = scmp.eq.s32.totalorder %s26, 8
      %p110 = por %p108, %p109
      %p112 = scmp.ne.s32.totalorder %s95, %s111
      %p113 = scmp.eq.s32.totalorder %s26, 0
      %p114 = por %p112, %p113
      %s116 = sadd.s32 %s115, 1
      %p119 = scmp.eq.s32.totalorder %s20, 8
      %p120 = scmp.ne.s32.totalorder %s115, %s117
      %p121 = scmp.eq.s32.totalorder %s20, 0
      %p122 = por %p120, %p121
      %p123 = scmp.ne.s32.totalorder %s115, %s117
      %p124 = scmp.eq.s32.totalorder %s25, 8
      %p125 = por %p123, %p124
      %p126 = scmp.ne.s32.totalorder %s117, %s118
      %p127 = scmp.eq.s32.totalorder %s25, 0
      %p128 = por %p126, %p127
      %p129 = scmp.ne.s32.totalorder %s117, %s118
      %p130 = scmp.eq.s32.totalorder %s26, 8
      %p131 = por %p129, %p130
      %p133 = scmp.ne.s32.totalorder %s118, %s132
      %p134 = scmp.eq.s32.totalorder %s26, 0
      %p135 = por %p133, %p134
      %s137 = sadd.s32 %s136, 1
      %p140 = scmp.eq.s32.totalorder %s20, 8
      %p141 = scmp.ne.s32.totalorder %s136, %s138
      %p142 = scmp.eq.s32.totalorder %s20, 0
      %p143 = por %p141, %p142
      %p144 = scmp.ne.s32.totalorder %s136, %s138
      %p145 = scmp.eq.s32.totalorder %s25, 8
      %p146 = por %p144, %p145
      %p147 = scmp.ne.s32.totalorder %s138, %s139
      %p148 = scmp.eq.s32.totalorder %s25, 0
      %p149 = por %p147, %p148
      %p150 = scmp.ne.s32.totalorder %s138, %s139
      %p151 = scmp.eq.s32.totalorder %s26, 8
      %p152 = por %p150, %p151
      %p154 = scmp.ne.s32.totalorder %s139, %s153
      %p155 = scmp.eq.s32.totalorder %s26, 0
      %p156 = por %p154, %p155
      %s158 = sadd.s32 %s157, 1
      %p161 = scmp.eq.s32.totalorder %s20, 8
      %p162 = scmp.ne.s32.totalorder %s157, %s159
      %p163 = scmp.eq.s32.totalorder %s20, 0
      %p164 = por %p162, %p163
      %p165 = scmp.ne.s32.totalorder %s157, %s159
      %p166 = scmp.eq.s32.totalorder %s25, 8
      %p167 = por %p165, %p166
      %p168 = scmp.ne.s32.totalorder %s159, %s160
      %p169 = scmp.eq.s32.totalorder %s25, 0
      %p170 = por %p168, %p169
      %p171 = scmp.ne.s32.totalorder %s159, %s160
      %p172 = scmp.eq.s32.totalorder %s26, 8
      %p173 = por %p171, %p172
      %p175 = scmp.ne.s32.totalorder %s160, %s174
      %p176 = scmp.eq.s32.totalorder %s26, 0
      %p177 = por %p175, %p176
      %s178 = ssub.s32 %s27, %s39
      %p179 = scmp.eq.s32.totalorder %s178, 0
      %s181 = sadd.s32 %s180, 1
      %s182 = scalar_select %p179, %s180, %s181
      %p185 = pneg %p179
      %p186 = scmp.eq.s32.totalorder %s20, 8
      %p187 = por %p185, %p186
      %p188 = scmp.ne.s32.totalorder %s180, %s183
      %p189 = scmp.eq.s32.totalorder %s20, 0
      %p190 = por %p188, %p189
      %p191 = scmp.ne.s32.totalorder %s180, %s183
      %p192 = scmp.eq.s32.totalorder %s25, 8
      %p193 = por %p191, %p192
      %p194 = scmp.ne.s32.totalorder %s183, %s184
      %p195 = scmp.eq.s32.totalorder %s25, 0
      %p196 = por %p194, %p195
      %p197 = scmp.ne.s32.totalorder %s183, %s184
      %p198 = scmp.eq.s32.totalorder %s26, 8
      %p199 = por %p197, %p198
      %p201 = scmp.ne.s32.totalorder %s184, %s200
      %p202 = scmp.eq.s32.totalorder %s26, 0
      %p203 = por %p201, %p202
      %p204 = scmp.le.s32.totalorder 1, %s20
      %p205 = scmp.lt.s32.totalorder %s20, 10
      %p206 = pnand %p204, %p205
      %p207 = pneg %p206
      // Predicated region
      $region9: #{tpu_custom_call.1} parent=5 // pred_check
        _
      $region10: #{tpu_custom_call.1} parent=5 // pred_check_branch
        %209 = sbr.rel (%p206) target = $region12
      $region11: #{tpu_custom_call.1} parent=5 // pred_region
        %s210 = ssub.s32 %s20, 1
        // Predicated region
        $region13: #{tpu_custom_call.1} parent=11 // pred_check
          %p211 = pneg %p81
        $region14: #{tpu_custom_call.1} parent=11 // pred_check_branch
          %213 = sbr.rel (%p211) target = $region16
        $region15: #{tpu_custom_call.1} parent=11 // pred_region
          %s215 = ssub.s32 3072, 3072
          %216 = vsyncadd [#allocation7], %s215
          %s217 = sshll.u32 [#allocation6], 4
          %s218 = int_to_ptr.vmem [resolvable:$true] %s217
          %223 = dma.hbm_to_vmem [thread:$0]  %s1, 3072, %s218, [#allocation7], 64, 64, 4
        $region16: #{tpu_custom_call.1} parent=11 // pred_fallthru
          _
        // Predicated region
        $region17: #{tpu_custom_call.1} parent=11 // pred_check
          %p224 = pneg %p128
        $region18: #{tpu_custom_call.1} parent=11 // pred_check_branch
          %226 = sbr.rel (%p224) target = $region20
        $region19: #{tpu_custom_call.1} parent=11 // pred_region
          %s228 = ssub.s32 1024, 1024
          %229 = vsyncadd [#allocation7], %s228
          %s230 = sshll.u32 [#allocation9], 4
          %s231 = int_to_ptr.vmem [resolvable:$true] %s230
          %236 = dma.hbm_to_vmem [thread:$0]  %s3, 1024, %s231, [#allocation7], 64, 64, 4
        $region20: #{tpu_custom_call.1} parent=11 // pred_fallthru
          _
        // Predicated region
        $region21: #{tpu_custom_call.1} parent=11 // pred_check
          %p237 = pneg %p149
        $region22: #{tpu_custom_call.1} parent=11 // pred_check_branch
          %239 = sbr.rel (%p237) target = $region24
        $region23: #{tpu_custom_call.1} parent=11 // pred_region
          %s241 = ssub.s32 1024, 1024
          %242 = vsyncadd [#allocation11], %s241
          %s243 = sshll.u32 [#allocation10], 4
          %s244 = int_to_ptr.vmem [resolvable:$true] %s243
          %249 = dma.hbm_to_vmem [thread:$0]  %s4, 1024, %s244, [#allocation11], 64, 64, 4
        $region24: #{tpu_custom_call.1} parent=11 // pred_fallthru
          _
        // Predicated region
        $region25: #{tpu_custom_call.1} parent=11 // pred_check
          %p250 = pneg %p170
        $region26: #{tpu_custom_call.1} parent=11 // pred_check_branch
          %252 = sbr.rel (%p250) target = $region28
        $region27: #{tpu_custom_call.1} parent=11 // pred_region
          _
        $region28: #{tpu_custom_call.1} parent=11 // pred_fallthru
          _
      $region12: #{tpu_custom_call.1} parent=5 // pred_fallthru
        _
      %p253 = scmp.lt.s32.totalorder %s20, 9
      // Predicated region
      $region29: #{tpu_custom_call.1} parent=5 // pred_check
        %p254 = pneg %p253
      $region30: #{tpu_custom_call.1} parent=5 // pred_check_branch
        %256 = sbr.rel (%p254) target = $region32
      $region31: #{tpu_custom_call.1} parent=5 // pred_region
        // Predicated region
        $region33: #{tpu_custom_call.1} parent=31 // pred_check
          %p257 = pneg %p54
        $region34: #{tpu_custom_call.1} parent=31 // pred_check_branch
          %259 = sbr.rel (%p257) target = $region36
        $region35: #{tpu_custom_call.1} parent=31 // pred_region
          %s260 = sand.u32 %s20, 1
          %s261 = scalar_lea.sflag [#allocation4], %s260
          %s262 = sand.u32 %s44, 1
          %s263 = smul.addr %s262, 64
          %s264 = scalar_lea.vmem [#allocation3], %s263
          %s265 = smul.u32 16, %s27
          %s267 = ssub.s32 1024, 1024
          %268 = vsyncadd %s261, %s267
          %s269 = smul.addr %s265, 3
          %s270 = sadd.s32 %s28, %s269
          %s271 = smul.addr %s270, 64
          %s272 = scalar_lea.hbm %s0, %s271
          %s273 = sshll.u32 %s264, 4
          %s274 = int_to_ptr.vmem [resolvable:$true] %s273
          %279 = dma.hbm_to_vmem [thread:$0]  %s272, 1024, %s274, %s261, 192, 64, 4
        $region36: #{tpu_custom_call.1} parent=31 // pred_fallthru
          _
        // Predicated region
        $region37: #{tpu_custom_call.1} parent=31 // pred_check
          %p280 = pneg %p101
        $region38: #{tpu_custom_call.1} parent=31 // pred_check_branch
          %282 = sbr.rel (%p280) target = $region40
        $region39: #{tpu_custom_call.1} parent=31 // pred_region
          %s283 = sand.u32 %s20, 1
          %s284 = scalar_lea.sflag [#allocation4], %s283
          %s285 = sand.u32 %s91, 1
          %s286 = smul.addr %s285, 128
          %s287 = scalar_lea.vmem [#allocation8], %s286
          %s288 = smul.u32 16, %s27
          %s290 = ssub.s32 2048, 2048
          %291 = vsyncadd %s284, %s290
          %s292 = smul.addr %s288, 128
          %s293 = scalar_lea.hbm %s2, %s292
          %s294 = sshll.u32 %s287, 4
          %s295 = int_to_ptr.vmem [resolvable:$true] %s294
          %300 = dma.hbm_to_vmem [thread:$0]  %s293, 2048, %s295, %s284, 128, 128, 8
        $region40: #{tpu_custom_call.1} parent=31 // pred_fallthru
          _
      $region32: #{tpu_custom_call.1} parent=5 // pred_fallthru
        _
      %p301 = scmp.le.s32.totalorder 1, %s20
      %p302 = scmp.lt.s32.totalorder %s20, 10
      %p303 = pnand %p301, %p302
      %p304 = pneg %p303
      // Predicated region
      $region41: #{tpu_custom_call.1} parent=5 // pred_check
        _
      $region42: #{tpu_custom_call.1} parent=5 // pred_check_branch
        %306 = sbr.rel (%p303) target = $region44
      $region43: #{tpu_custom_call.1} parent=5 // pred_region
        %s307 = ssub.s32 %s20, 1
        %s308 = sand.u32 %s25, 1
        %s309 = scalar_lea.sflag [#allocation4], %s308
        %s310 = sand.u32 %s47, 1
        %s311 = smul.addr %s310, 64
        %s312 = scalar_lea.vmem [#allocation3], %s311
        // Predicated region
        $region45: #{tpu_custom_call.1} parent=43 // pred_check
          %p313 = pneg %p60
        $region46: #{tpu_custom_call.1} parent=43 // pred_check_branch
          %315 = sbr.rel (%p313) target = $region48
        $region47: #{tpu_custom_call.1} parent=43 // pred_region
          %316 = dma.done %s309, 1024
        $region48: #{tpu_custom_call.1} parent=43 // pred_fallthru
          _
        // Predicated region
        $region49: #{tpu_custom_call.1} parent=43 // pred_check
          %p317 = pneg %p81
        $region50: #{tpu_custom_call.1} parent=43 // pred_check_branch
          %319 = sbr.rel (%p317) target = $region52
        $region51: #{tpu_custom_call.1} parent=43 // pred_region
          %320 = dma.done [#allocation7], 3072
        $region52: #{tpu_custom_call.1} parent=43 // pred_fallthru
          _
        %s321 = sand.u32 %s25, 1
        %s322 = scalar_lea.sflag [#allocation4], %s321
        %s323 = sand.u32 %s94, 1
        %s324 = smul.addr %s323, 128
        %s325 = scalar_lea.vmem [#allocation8], %s324
        // Predicated region
        $region53: #{tpu_custom_call.1} parent=43 // pred_check
          %p326 = pneg %p107
        $region54: #{tpu_custom_call.1} parent=43 // pred_check_branch
          %328 = sbr.rel (%p326) target = $region56
        $region55: #{tpu_custom_call.1} parent=43 // pred_region
          %329 = dma.done %s322, 2048
        $region56: #{tpu_custom_call.1} parent=43 // pred_fallthru
          _
        // Predicated region
        $region57: #{tpu_custom_call.1} parent=43 // pred_check
          %p330 = pneg %p128
        $region58: #{tpu_custom_call.1} parent=43 // pred_check_branch
          %332 = sbr.rel (%p330) target = $region60
        $region59: #{tpu_custom_call.1} parent=43 // pred_region
          %333 = dma.done [#allocation7], 1024
        $region60: #{tpu_custom_call.1} parent=43 // pred_fallthru
          _
        // Predicated region
        $region61: #{tpu_custom_call.1} parent=43 // pred_check
          %p334 = pneg %p149
        $region62: #{tpu_custom_call.1} parent=43 // pred_check_branch
          %336 = sbr.rel (%p334) target = $region64
        $region63: #{tpu_custom_call.1} parent=43 // pred_region
          %337 = dma.done [#allocation11], 1024
        $region64: #{tpu_custom_call.1} parent=43 // pred_fallthru
          _
        %s338 = sand.u32 %s25, 1
        %s339 = scalar_lea.sflag [#allocation4], %s338
        %s340 = sand.u32 %s47, 1
        %s341 = smul.addr %s340, 64
        %s342 = scalar_lea.vmem [#allocation3], %s341
        %p343 = pneg %p60
        %p344 = pneg %p57
        %p345 = pneg %p81
        %p346 = pneg %p78
        %s347 = sand.u32 %s25, 1
        %s348 = scalar_lea.sflag [#allocation4], %s347
        %s349 = sand.u32 %s94, 1
        %s350 = smul.addr %s349, 128
        %s351 = scalar_lea.vmem [#allocation8], %s350
        %p352 = pneg %p107
        %p353 = pneg %p104
        %p354 = pneg %p128
        %p355 = pneg %p125
        %p356 = pneg %p149
        %p357 = pneg %p146
        %p358 = pneg %p170
        %p359 = pneg %p167
        %p360 = pneg %p196
        %p361 = pneg %p193
        %s362 = sand.u32 %s183, 1
        %s363 = scalar_lea.sflag [#allocation5], %s362
        %s364 = sand.u32 %s183, 1
        %s365 = smul.addr %s364, 128
        %s366 = scalar_lea.vmem [#allocation12], %s365
        %s367 = smul.u32 16, %s29
        %s368 = smul.u32 16, %s29
        %s369 = smul.u32 16, %s29
        %p371 = scmp.eq.s32.totalorder %s30, 0
        // Predicated region
        $region65: #{tpu_custom_call.1} parent=43 // pred_check
          %p372 = pneg %p371
        $region66: #{tpu_custom_call.1} parent=43 // pred_check_branch
          %374 = sbr.rel (%p372) target = $region68
        $region67: #{tpu_custom_call.1} parent=43 // pred_region
          %375 = vst [vmem:[#allocation2] sm:$0xff] 0.0
          %376 = vst [vmem:[#allocation2 + $0x8] sm:$0xff] 0.0
          %377 = vst [vmem:[#allocation2 + $0x10] sm:$0xff] 0.0
          %378 = vst [vmem:[#allocation2 + $0x18] sm:$0xff] 0.0
          %379 = vst [vmem:[#allocation2 + $0x20] sm:$0xff] 0.0
          %380 = vst [vmem:[#allocation2 + $0x28] sm:$0xff] 0.0
          %381 = vst [vmem:[#allocation2 + $0x30] sm:$0xff] 0.0
          %382 = vst [vmem:[#allocation2 + $0x38] sm:$0xff] 0.0
          %383 = vst [vmem:[#allocation2 + $0x40] sm:$0xff] 0.0
          %384 = vst [vmem:[#allocation2 + $0x48] sm:$0xff] 0.0
          %385 = vst [vmem:[#allocation2 + $0x50] sm:$0xff] 0.0
          %386 = vst [vmem:[#allocation2 + $0x58] sm:$0xff] 0.0
          %387 = vst [vmem:[#allocation2 + $0x60] sm:$0xff] 0.0
          %388 = vst [vmem:[#allocation2 + $0x68] sm:$0xff] 0.0
          %389 = vst [vmem:[#allocation2 + $0x70] sm:$0xff] 0.0
          %390 = vst [vmem:[#allocation2 + $0x78] sm:$0xff] 0.0
        $region68: #{tpu_custom_call.1} parent=43 // pred_fallthru
          _
        %s391 = smul.u32 %s30, 128
        %s392 = sshra.s32 %s391, 3
        %s393 = sand.u32 %s391, 7
        %s394 = smul.addr %s392, 4
        %s395 = scalar_lea.vmem [#allocation6], %s394
        %v396 = vld [vmem:[%s395] sm:$0xf]
        %v397 = vld [vmem:[%s395 + $0x4] sm:$0xf]
        %v398 = vld [vmem:[%s395 + $0x8] sm:$0xf]
        %v399 = vld [vmem:[%s395 + $0xc] sm:$0xf]
        %v400 = vld [vmem:[%s395 + $0x10] sm:$0xf]
        %v401 = vld [vmem:[%s395 + $0x14] sm:$0xf]
        %v402 = vld [vmem:[%s395 + $0x18] sm:$0xf]
        %v403 = vld [vmem:[%s395 + $0x1c] sm:$0xf]
        %v404 = vld [vmem:[%s395 + $0x20] sm:$0xf]
        %v405 = vld [vmem:[%s395 + $0x24] sm:$0xf]
        %v406 = vld [vmem:[%s395 + $0x28] sm:$0xf]
        %v407 = vld [vmem:[%s395 + $0x2c] sm:$0xf]
        %v408 = vld [vmem:[%s395 + $0x30] sm:$0xf]
        %v409 = vld [vmem:[%s395 + $0x34] sm:$0xf]
        %v410 = vld [vmem:[%s395 + $0x38] sm:$0xf]
        %v411 = vld [vmem:[%s395 + $0x3c] sm:$0xf]
        %v412 = vld [vmem:[#allocation2] sm:$0xff]
        %v413 = vld [vmem:[#allocation2 + $0x8] sm:$0xff]
        %v414 = vld [vmem:[#allocation2 + $0x10] sm:$0xff]
        %v415 = vld [vmem:[#allocation2 + $0x18] sm:$0xff]
        %v416 = vld [vmem:[#allocation2 + $0x20] sm:$0xff]
        %v417 = vld [vmem:[#allocation2 + $0x28] sm:$0xff]
        %v418 = vld [vmem:[#allocation2 + $0x30] sm:$0xff]
        %v419 = vld [vmem:[#allocation2 + $0x38] sm:$0xff]
        %v420 = vld [vmem:[#allocation2 + $0x40] sm:$0xff]
        %v421 = vld [vmem:[#allocation2 + $0x48] sm:$0xff]
        %v422 = vld [vmem:[#allocation2 + $0x50] sm:$0xff]
        %v423 = vld [vmem:[#allocation2 + $0x58] sm:$0xff]
        %v424 = vld [vmem:[#allocation2 + $0x60] sm:$0xff]
        %v425 = vld [vmem:[#allocation2 + $0x68] sm:$0xff]
        %v426 = vld [vmem:[#allocation2 + $0x70] sm:$0xff]
        %v427 = vld [vmem:[#allocation2 + $0x78] sm:$0xff]
        %v428 = vld [vmem:[%s312] sm:$0xf]
        %v429 = vld [vmem:[%s312 + $0x4] sm:$0xf]
        %v430 = vld [vmem:[%s312 + $0x8] sm:$0xf]
        %v431 = vld [vmem:[%s312 + $0xc] sm:$0xf]
        %v432 = vld [vmem:[%s312 + $0x10] sm:$0xf]
        %v433 = vld [vmem:[%s312 + $0x14] sm:$0xf]
        %v434 = vld [vmem:[%s312 + $0x18] sm:$0xf]
        %v435 = vld [vmem:[%s312 + $0x1c] sm:$0xf]
        %v436 = vld [vmem:[%s312 + $0x20] sm:$0xf]
        %v437 = vld [vmem:[%s312 + $0x24] sm:$0xf]
        %v438 = vld [vmem:[%s312 + $0x28] sm:$0xf]
        %v439 = vld [vmem:[%s312 + $0x2c] sm:$0xf]
        %v440 = vld [vmem:[%s312 + $0x30] sm:$0xf]
        %v441 = vld [vmem:[%s312 + $0x34] sm:$0xf]
        %v442 = vld [vmem:[%s312 + $0x38] sm:$0xf]
        %v443 = vld [vmem:[%s312 + $0x3c] sm:$0xf]
        %v460 = vunpack.c.l.b16 %v428
        %v461 = vunpack.c.l.b16 %v429
        %v462 = vunpack.c.l.b16 %v430
        %v463 = vunpack.c.l.b16 %v431
        %v464 = vunpack.c.l.b16 %v432
        %v465 = vunpack.c.l.b16 %v433
        %v466 = vunpack.c.l.b16 %v434
        %v467 = vunpack.c.l.b16 %v435
        %v468 = vunpack.c.l.b16 %v436
        %v469 = vunpack.c.l.b16 %v437
        %v470 = vunpack.c.l.b16 %v438
        %v471 = vunpack.c.l.b16 %v439
        %v472 = vunpack.c.l.b16 %v440
        %v473 = vunpack.c.l.b16 %v441
        %v474 = vunpack.c.l.b16 %v442
        %v475 = vunpack.c.l.b16 %v443
        %v476 = vpack.c.b16 %v461, %v460
        %v477 = vpack.c.b16 %v463, %v462
        %v478 = vpack.c.b16 %v465, %v464
        %v479 = vpack.c.b16 %v467, %v466
        %v480 = vpack.c.b16 %v469, %v468
        %v481 = vpack.c.b16 %v471, %v470
        %v482 = vpack.c.b16 %v473, %v472
        %v483 = vpack.c.b16 %v475, %v474
        %v508 = vunpack.c.l.b16 %v396
        %v509 = vunpack.c.l.b16 %v397
        %v510 = vunpack.c.l.b16 %v398
        %v511 = vunpack.c.l.b16 %v399
        %v512 = vunpack.c.l.b16 %v400
        %v513 = vunpack.c.l.b16 %v401
        %v514 = vunpack.c.l.b16 %v402
        %v515 = vunpack.c.l.b16 %v403
        %v516 = vunpack.c.l.b16 %v404
        %v517 = vunpack.c.l.b16 %v405
        %v518 = vunpack.c.l.b16 %v406
        %v519 = vunpack.c.l.b16 %v407
        %v520 = vunpack.c.l.b16 %v408
        %v521 = vunpack.c.l.b16 %v409
        %v522 = vunpack.c.l.b16 %v410
        %v523 = vunpack.c.l.b16 %v411
        %v524 = vpack.c.b16 %v509, %v508
        %v525 = vpack.c.b16 %v511, %v510
        %v526 = vpack.c.b16 %v513, %v512
        %v527 = vpack.c.b16 %v515, %v514
        %v528 = vpack.c.b16 %v517, %v516
        %v529 = vpack.c.b16 %v519, %v518
        %v530 = vpack.c.b16 %v521, %v520
        %v531 = vpack.c.b16 %v523, %v522
        %540 = vmatprep.subr.bf16.mxu0 0
        %541 = vmatpush1.bf16.msra.mxu0 %v524
        %542 = vmatprep.subr.bf16.mxu0 0
        %543 = vmatpush1.bf16.msra.mxu0 %v525
        %544 = vmatprep.subr.bf16.mxu0 0
        %545 = vmatpush1.bf16.msra.mxu0 %v526
        %546 = vmatprep.subr.bf16.mxu0 0
        %547 = vmatpush1.bf16.msra.mxu0 %v527
        %548 = vmatprep.subr.bf16.mxu0 0
        %549 = vmatpush1.bf16.msra.mxu0 %v528
        %550 = vmatprep.subr.bf16.mxu0 0
        %551 = vmatpush1.bf16.msra.mxu0 %v529
        %552 = vmatprep.subr.bf16.mxu0 0
        %553 = vmatpush1.bf16.msra.mxu0 %v530
        %554 = vmatprep.subr.bf16.mxu0 0
        %555 = vmatpush1.bf16.msra.mxu0 %v531
        %556 = vmatprep.subr.bf16.mxu0 0
        %557 = vmatpush1.bf16.msra.mxu0 0
        %558 = vmatprep.subr.bf16.mxu0 0
        %559 = vmatpush1.bf16.msra.mxu0 0
        %560 = vmatprep.subr.bf16.mxu0 0
        %561 = vmatpush1.bf16.msra.mxu0 0
        %562 = vmatprep.subr.bf16.mxu0 0
        %563 = vmatpush1.bf16.msra.mxu0 0
        %564 = vmatprep.subr.bf16.mxu0 0
        %565 = vmatpush1.bf16.msra.mxu0 0
        %566 = vmatprep.subr.bf16.mxu0 0
        %567 = vmatpush1.bf16.msra.mxu0 0
        %568 = vmatprep.subr.bf16.mxu0 0
        %569 = vmatpush1.bf16.msra.mxu0 0
        %570 = vmatprep.subr.bf16.mxu0 0
        %571 = vmatpush1.bf16.msra.mxu0 0
        %572 = vmatprep.mubr.bf16.mxu0 0
        %573 = vmatmul.mubr.bf16.gmra.mrb[0].mxu0 %v476
        %v574 = vpop.f32.mrb[0].mxu0
        %v575 = vadd.f32 0.0, %v574
        %v576 = vpop.f32.mrb[0].mxu0
        %v577 = vpop.f32.mrb[0].mxu0
        %v578 = vadd.f32 0.0, %v577
        %v579 = vpop.f32.mrb[0].mxu0
        %580 = vmatprep.mubr.bf16.mxu0 0
        %581 = vmatmul.mubr.bf16.gmra.mrb[0].mxu0 %v477
        %v582 = vpop.f32.mrb[0].mxu0
        %v583 = vadd.f32 0.0, %v582
        %v584 = vpop.f32.mrb[0].mxu0
        %v585 = vpop.f32.mrb[0].mxu0
        %v586 = vadd.f32 0.0, %v585
        %v587 = vpop.f32.mrb[0].mxu0
        %588 = vmatprep.mubr.bf16.mxu0 0
        %589 = vmatmul.mubr.bf16.gmra.mrb[0].mxu0 %v478
        %v590 = vpop.f32.mrb[0].mxu0
        %v591 = vadd.f32 0.0, %v590
        %v592 = vpop.f32.mrb[0].mxu0
        %v593 = vpop.f32.mrb[0].mxu0
        %v594 = vadd.f32 0.0, %v593
        %v595 = vpop.f32.mrb[0].mxu0
        %596 = vmatprep.mubr.bf16.mxu0 0
        %597 = vmatmul.mubr.bf16.gmra.mrb[0].mxu0 %v479
        %v598 = vpop.f32.mrb[0].mxu0
        %v599 = vadd.f32 0.0, %v598
        %v600 = vpop.f32.mrb[0].mxu0
        %v601 = vpop.f32.mrb[0].mxu0
        %v602 = vadd.f32 0.0, %v601
        %v603 = vpop.f32.mrb[0].mxu0
        %604 = vmatprep.mubr.bf16.mxu0 0
        %605 = vmatmul.mubr.bf16.gmra.mrb[0].mxu0 %v480
        %v606 = vpop.f32.mrb[0].mxu0
        %v607 = vadd.f32 0.0, %v606
        %v608 = vpop.f32.mrb[0].mxu0
        %v609 = vpop.f32.mrb[0].mxu0
        %v610 = vadd.f32 0.0, %v609
        %v611 = vpop.f32.mrb[0].mxu0
        %612 = vmatprep.mubr.bf16.mxu0 0
        %613 = vmatmul.mubr.bf16.gmra.mrb[0].mxu0 %v481
        %v614 = vpop.f32.mrb[0].mxu0
        %v615 = vadd.f32 0.0, %v614
        %v616 = vpop.f32.mrb[0].mxu0
        %v617 = vpop.f32.mrb[0].mxu0
        %v618 = vadd.f32 0.0, %v617
        %v619 = vpop.f32.mrb[0].mxu0
        %620 = vmatprep.mubr.bf16.mxu0 0
        %621 = vmatmul.mubr.bf16.gmra.mrb[0].mxu0 %v482
        %v622 = vpop.f32.mrb[0].mxu0
        %v623 = vadd.f32 0.0, %v622
        %v624 = vpop.f32.mrb[0].mxu0
        %v625 = vpop.f32.mrb[0].mxu0
        %v626 = vadd.f32 0.0, %v625
        %v627 = vpop.f32.mrb[0].mxu0
        %628 = vmatprep.mubr.bf16.mxu0 0
        %629 = vmatmul.mubr.bf16.gmra.mrb[0].mxu0 %v483
        %v630 = vpop.f32.mrb[0].mxu0
        %v631 = vadd.f32 0.0, %v630
        %v632 = vpop.f32.mrb[0].mxu0
        %v633 = vpop.f32.mrb[0].mxu0
        %v634 = vadd.f32 0.0, %v633
        %v635 = vpop.f32.mrb[0].mxu0
        %636 = vdwg.mxu0
        %v637 = vadd.f32 %v412, %v575
        %v638 = vadd.f32 %v413, %v578
        %v639 = vadd.f32 %v414, %v583
        %v640 = vadd.f32 %v415, %v586
        %v641 = vadd.f32 %v416, %v591
        %v642 = vadd.f32 %v417, %v594
        %v643 = vadd.f32 %v418, %v599
        %v644 = vadd.f32 %v419, %v602
        %v645 = vadd.f32 %v420, %v607
        %v646 = vadd.f32 %v421, %v610
        %v647 = vadd.f32 %v422, %v615
        %v648 = vadd.f32 %v423, %v618
        %v649 = vadd.f32 %v424, %v623
        %v650 = vadd.f32 %v425, %v626
        %v651 = vadd.f32 %v426, %v631
        %v652 = vadd.f32 %v427, %v634
        %653 = vst [vmem:[#allocation2] sm:$0xff] %v637
        %654 = vst [vmem:[#allocation2 + $0x8] sm:$0xff] %v638
        %655 = vst [vmem:[#allocation2 + $0x10] sm:$0xff] %v639
        %656 = vst [vmem:[#allocation2 + $0x18] sm:$0xff] %v640
        %657 = vst [vmem:[#allocation2 + $0x20] sm:$0xff] %v641
        %658 = vst [vmem:[#allocation2 + $0x28] sm:$0xff] %v642
        %659 = vst [vmem:[#allocation2 + $0x30] sm:$0xff] %v643
        %660 = vst [vmem:[#allocation2 + $0x38] sm:$0xff] %v644
        %661 = vst [vmem:[#allocation2 + $0x40] sm:$0xff] %v645
        %662 = vst [vmem:[#allocation2 + $0x48] sm:$0xff] %v646
        %663 = vst [vmem:[#allocation2 + $0x50] sm:$0xff] %v647
        %664 = vst [vmem:[#allocation2 + $0x58] sm:$0xff] %v648
        %665 = vst [vmem:[#allocation2 + $0x60] sm:$0xff] %v649
        %666 = vst [vmem:[#allocation2 + $0x68] sm:$0xff] %v650
        %667 = vst [vmem:[#allocation2 + $0x70] sm:$0xff] %v651
        %668 = vst [vmem:[#allocation2 + $0x78] sm:$0xff] %v652
        %p669 = scmp.eq.s32.totalorder %s30, 2
        // Predicated region
        $region69: #{tpu_custom_call.1} parent=43 // pred_check
          %p670 = pneg %p669
        $region70: #{tpu_custom_call.1} parent=43 // pred_check_branch
          %672 = sbr.rel (%p670) target = $region72
        $region71: #{tpu_custom_call.1} parent=43 // pred_region
          %v673 = vld [vmem:[#allocation2] sm:$0xff]
          %v674 = vld [vmem:[#allocation2 + $0x8] sm:$0xff]
          %v675 = vld [vmem:[#allocation2 + $0x10] sm:$0xff]
          %v676 = vld [vmem:[#allocation2 + $0x18] sm:$0xff]
          %v677 = vld [vmem:[#allocation2 + $0x20] sm:$0xff]
          %v678 = vld [vmem:[#allocation2 + $0x28] sm:$0xff]
          %v679 = vld [vmem:[#allocation2 + $0x30] sm:$0xff]
          %v680 = vld [vmem:[#allocation2 + $0x38] sm:$0xff]
          %v681 = vld [vmem:[#allocation2 + $0x40] sm:$0xff]
          %v682 = vld [vmem:[#allocation2 + $0x48] sm:$0xff]
          %v683 = vld [vmem:[#allocation2 + $0x50] sm:$0xff]
          %v684 = vld [vmem:[#allocation2 + $0x58] sm:$0xff]
          %v685 = vld [vmem:[#allocation2 + $0x60] sm:$0xff]
          %v686 = vld [vmem:[#allocation2 + $0x68] sm:$0xff]
          %v687 = vld [vmem:[#allocation2 + $0x70] sm:$0xff]
          %v688 = vld [vmem:[#allocation2 + $0x78] sm:$0xff]
          %v689 = vpack.c.bf16 %v674, %v673
          %v690 = vpack.c.bf16 %v676, %v675
          %v691 = vpack.c.bf16 %v678, %v677
          %v692 = vpack.c.bf16 %v680, %v679
          %v693 = vpack.c.bf16 %v682, %v681
          %v694 = vpack.c.bf16 %v684, %v683
          %v695 = vpack.c.bf16 %v686, %v685
          %v696 = vpack.c.bf16 %v688, %v687
          %v697 = vld [vmem:[#allocation9] sm:$0xf]
          %v698 = vld [vmem:[#allocation9 + $0x4] sm:$0xf]
          %v699 = vld [vmem:[#allocation9 + $0x8] sm:$0xf]
          %v700 = vld [vmem:[#allocation9 + $0xc] sm:$0xf]
          %v701 = vld [vmem:[#allocation9 + $0x10] sm:$0xf]
          %v702 = vld [vmem:[#allocation9 + $0x14] sm:$0xf]
          %v703 = vld [vmem:[#allocation9 + $0x18] sm:$0xf]
          %v704 = vld [vmem:[#allocation9 + $0x1c] sm:$0xf]
          %v705 = vld [vmem:[#allocation9 + $0x20] sm:$0xf]
          %v706 = vld [vmem:[#allocation9 + $0x24] sm:$0xf]
          %v707 = vld [vmem:[#allocation9 + $0x28] sm:$0xf]
          %v708 = vld [vmem:[#allocation9 + $0x2c] sm:$0xf]
          %v709 = vld [vmem:[#allocation9 + $0x30] sm:$0xf]
          %v710 = vld [vmem:[#allocation9 + $0x34] sm:$0xf]
          %v711 = vld [vmem:[#allocation9 + $0x38] sm:$0xf]
          %v712 = vld [vmem:[#allocation9 + $0x3c] sm:$0xf]
          %v713 = vld [vmem:[%s325] sm:$0xff]
          %v714 = vld [vmem:[%s325 + $0x8] sm:$0xff]
          %v715 = vld [vmem:[%s325 + $0x10] sm:$0xff]
          %v716 = vld [vmem:[%s325 + $0x18] sm:$0xff]
          %v717 = vld [vmem:[%s325 + $0x20] sm:$0xff]
          %v718 = vld [vmem:[%s325 + $0x28] sm:$0xff]
          %v719 = vld [vmem:[%s325 + $0x30] sm:$0xff]
          %v720 = vld [vmem:[%s325 + $0x38] sm:$0xff]
          %v721 = vld [vmem:[%s325 + $0x40] sm:$0xff]
          %v722 = vld [vmem:[%s325 + $0x48] sm:$0xff]
          %v723 = vld [vmem:[%s325 + $0x50] sm:$0xff]
          %v724 = vld [vmem:[%s325 + $0x58] sm:$0xff]
          %v725 = vld [vmem:[%s325 + $0x60] sm:$0xff]
          %v726 = vld [vmem:[%s325 + $0x68] sm:$0xff]
          %v727 = vld [vmem:[%s325 + $0x70] sm:$0xff]
          %v728 = vld [vmem:[%s325 + $0x78] sm:$0xff]
          %v745 = vunpack.c.l.b16 %v697
          %v746 = vunpack.c.l.b16 %v698
          %v747 = vunpack.c.l.b16 %v699
          %v748 = vunpack.c.l.b16 %v700
          %v749 = vunpack.c.l.b16 %v701
          %v750 = vunpack.c.l.b16 %v702
          %v751 = vunpack.c.l.b16 %v703
          %v752 = vunpack.c.l.b16 %v704
          %v753 = vunpack.c.l.b16 %v705
          %v754 = vunpack.c.l.b16 %v706
          %v755 = vunpack.c.l.b16 %v707
          %v756 = vunpack.c.l.b16 %v708
          %v757 = vunpack.c.l.b16 %v709
          %v758 = vunpack.c.l.b16 %v710
          %v759 = vunpack.c.l.b16 %v711
          %v760 = vunpack.c.l.b16 %v712
          %v761 = vpack.c.b16 %v746, %v745
          %v762 = vpack.c.b16 %v748, %v747
          %v763 = vpack.c.b16 %v750, %v749
          %v764 = vpack.c.b16 %v752, %v751
          %v765 = vpack.c.b16 %v754, %v753
          %v766 = vpack.c.b16 %v756, %v755
          %v767 = vpack.c.b16 %v758, %v757
          %v768 = vpack.c.b16 %v760, %v759
          %777 = vmatprep.subr.bf16.mxu0 0
          %778 = vmatpush1.bf16.msra.mxu0 %v761
          %779 = vmatprep.subr.bf16.mxu0 0
          %780 = vmatpush1.bf16.msra.mxu0 %v762
          %781 = vmatprep.subr.bf16.mxu0 0
          %782 = vmatpush1.bf16.msra.mxu0 %v763
          %783 = vmatprep.subr.bf16.mxu0 0
          %784 = vmatpush1.bf16.msra.mxu0 %v764
          %785 = vmatprep.subr.bf16.mxu0 0
          %786 = vmatpush1.bf16.msra.mxu0 %v765
          %787 = vmatprep.subr.bf16.mxu0 0
          %788 = vmatpush1.bf16.msra.mxu0 %v766
          %789 = vmatprep.subr.bf16.mxu0 0
          %790 = vmatpush1.bf16.msra.mxu0 %v767
          %791 = vmatprep.subr.bf16.mxu0 0
          %792 = vmatpush1.bf16.msra.mxu0 %v768
          %793 = vmatprep.subr.bf16.mxu0 0
          %794 = vmatpush1.bf16.msra.mxu0 0
          %795 = vmatprep.subr.bf16.mxu0 0
          %796 = vmatpush1.bf16.msra.mxu0 0
          %797 = vmatprep.subr.bf16.mxu0 0
          %798 = vmatpush1.bf16.msra.mxu0 0
          %799 = vmatprep.subr.bf16.mxu0 0
          %800 = vmatpush1.bf16.msra.mxu0 0
          %801 = vmatprep.subr.bf16.mxu0 0
          %802 = vmatpush1.bf16.msra.mxu0 0
          %803 = vmatprep.subr.bf16.mxu0 0
          %804 = vmatpush1.bf16.msra.mxu0 0
          %805 = vmatprep.subr.bf16.mxu0 0
          %806 = vmatpush1.bf16.msra.mxu0 0
          %807 = vmatprep.subr.bf16.mxu0 0
          %808 = vmatpush1.bf16.msra.mxu0 0
          %809 = vmatprep.mubr.bf16.mxu0 0
          %810 = vmatmul.mubr.bf16.gmra.mrb[0].mxu0 %v689
          %v811 = vpop.f32.mrb[0].mxu0
          %v812 = vadd.f32 %v713, %v811
          %v813 = vpop.f32.mrb[0].mxu0
          %v814 = vpop.f32.mrb[0].mxu0
          %v815 = vadd.f32 %v714, %v814
          %v816 = vpop.f32.mrb[0].mxu0
          %817 = vmatprep.mubr.bf16.mxu0 0
          %818 = vmatmul.mubr.bf16.gmra.mrb[0].mxu0 %v690
          %v819 = vpop.f32.mrb[0].mxu0
          %v820 = vadd.f32 %v715, %v819
          %v821 = vpop.f32.mrb[0].mxu0
          %v822 = vpop.f32.mrb[0].mxu0
          %v823 = vadd.f32 %v716, %v822
          %v824 = vpop.f32.mrb[0].mxu0
          %825 = vmatprep.mubr.bf16.mxu0 0
          %826 = vmatmul.mubr.bf16.gmra.mrb[0].mxu0 %v691
          %v827 = vpop.f32.mrb[0].mxu0
          %v828 = vadd.f32 %v717, %v827
          %v829 = vpop.f32.mrb[0].mxu0
          %v830 = vpop.f32.mrb[0].mxu0
          %v831 = vadd.f32 %v718, %v830
          %v832 = vpop.f32.mrb[0].mxu0
          %833 = vmatprep.mubr.bf16.mxu0 0
          %834 = vmatmul.mubr.bf16.gmra.mrb[0].mxu0 %v692
          %v835 = vpop.f32.mrb[0].mxu0
          %v836 = vadd.f32 %v719, %v835
          %v837 = vpop.f32.mrb[0].mxu0
          %v838 = vpop.f32.mrb[0].mxu0
          %v839 = vadd.f32 %v720, %v838
          %v840 = vpop.f32.mrb[0].mxu0
          %841 = vmatprep.mubr.bf16.mxu0 0
          %842 = vmatmul.mubr.bf16.gmra.mrb[0].mxu0 %v693
          %v843 = vpop.f32.mrb[0].mxu0
          %v844 = vadd.f32 %v721, %v843
          %v845 = vpop.f32.mrb[0].mxu0
          %v846 = vpop.f32.mrb[0].mxu0
          %v847 = vadd.f32 %v722, %v846
          %v848 = vpop.f32.mrb[0].mxu0
          %849 = vmatprep.mubr.bf16.mxu0 0
          %850 = vmatmul.mubr.bf16.gmra.mrb[0].mxu0 %v694
          %v851 = vpop.f32.mrb[0].mxu0
          %v852 = vadd.f32 %v723, %v851
          %v853 = vpop.f32.mrb[0].mxu0
          %v854 = vpop.f32.mrb[0].mxu0
          %v855 = vadd.f32 %v724, %v854
          %v856 = vpop.f32.mrb[0].mxu0
          %857 = vmatprep.mubr.bf16.mxu0 0
          %858 = vmatmul.mubr.bf16.gmra.mrb[0].mxu0 %v695
          %v859 = vpop.f32.mrb[0].mxu0
          %v860 = vadd.f32 %v725, %v859
          %v861 = vpop.f32.mrb[0].mxu0
          %v862 = vpop.f32.mrb[0].mxu0
          %v863 = vadd.f32 %v726, %v862
          %v864 = vpop.f32.mrb[0].mxu0
          %865 = vmatprep.mubr.bf16.mxu0 0
          %866 = vmatmul.mubr.bf16.gmra.mrb[0].mxu0 %v696
          %v867 = vpop.f32.mrb[0].mxu0
          %v868 = vadd.f32 %v727, %v867
          %v869 = vpop.f32.mrb[0].mxu0
          %v870 = vpop.f32.mrb[0].mxu0
          %v871 = vadd.f32 %v728, %v870
          %v872 = vpop.f32.mrb[0].mxu0
          %873 = vdwg.mxu0
          %v874 = vmax.f32 %v812, 0.0
          %v875 = vmax.f32 %v815, 0.0
          %v876 = vmax.f32 %v820, 0.0
          %v877 = vmax.f32 %v823, 0.0
          %v878 = vmax.f32 %v828, 0.0
          %v879 = vmax.f32 %v831, 0.0
          %v880 = vmax.f32 %v836, 0.0
          %v881 = vmax.f32 %v839, 0.0
          %v882 = vmax.f32 %v844, 0.0
          %v883 = vmax.f32 %v847, 0.0
          %v884 = vmax.f32 %v852, 0.0
          %v885 = vmax.f32 %v855, 0.0
          %v886 = vmax.f32 %v860, 0.0
          %v887 = vmax.f32 %v863, 0.0
          %v888 = vmax.f32 %v868, 0.0
          %v889 = vmax.f32 %v871, 0.0
          %v890 = vpack.c.bf16 %v875, %v874
          %v891 = vpack.c.bf16 %v877, %v876
          %v892 = vpack.c.bf16 %v879, %v878
          %v893 = vpack.c.bf16 %v881, %v880
          %v894 = vpack.c.bf16 %v883, %v882
          %v895 = vpack.c.bf16 %v885, %v884
          %v896 = vpack.c.bf16 %v887, %v886
          %v897 = vpack.c.bf16 %v889, %v888
          %v898 = vld [vmem:[#allocation10] sm:$0xf]
          %v899 = vld [vmem:[#allocation10 + $0x4] sm:$0xf]
          %v900 = vld [vmem:[#allocation10 + $0x8] sm:$0xf]
          %v901 = vld [vmem:[#allocation10 + $0xc] sm:$0xf]
          %v902 = vld [vmem:[#allocation10 + $0x10] sm:$0xf]
          %v903 = vld [vmem:[#allocation10 + $0x14] sm:$0xf]
          %v904 = vld [vmem:[#allocation10 + $0x18] sm:$0xf]
          %v905 = vld [vmem:[#allocation10 + $0x1c] sm:$0xf]
          %v906 = vld [vmem:[#allocation10 + $0x20] sm:$0xf]
          %v907 = vld [vmem:[#allocation10 + $0x24] sm:$0xf]
          %v908 = vld [vmem:[#allocation10 + $0x28] sm:$0xf]
          %v909 = vld [vmem:[#allocation10 + $0x2c] sm:$0xf]
          %v910 = vld [vmem:[#allocation10 + $0x30] sm:$0xf]
          %v911 = vld [vmem:[#allocation10 + $0x34] sm:$0xf]
          %v912 = vld [vmem:[#allocation10 + $0x38] sm:$0xf]
          %v913 = vld [vmem:[#allocation10 + $0x3c] sm:$0xf]
          %v914 = vld [vmem:[%s5] sm:$0x1]
          %v916 = vlaneseq
          %v917 = vshrl.u32 %v916, 7
          %v918 = vsub.s32 0, %v917
          %v919 = vrot.slane %v914, %v918
          %v937 = vunpack.c.l.b16 %v898
          %v938 = vunpack.c.l.b16 %v899
          %v939 = vunpack.c.l.b16 %v900
          %v940 = vunpack.c.l.b16 %v901
          %v941 = vunpack.c.l.b16 %v902
          %v942 = vunpack.c.l.b16 %v903
          %v943 = vunpack.c.l.b16 %v904
          %v944 = vunpack.c.l.b16 %v905
          %v945 = vunpack.c.l.b16 %v906
          %v946 = vunpack.c.l.b16 %v907
          %v947 = vunpack.c.l.b16 %v908
          %v948 = vunpack.c.l.b16 %v909
          %v949 = vunpack.c.l.b16 %v910
          %v950 = vunpack.c.l.b16 %v911
          %v951 = vunpack.c.l.b16 %v912
          %v952 = vunpack.c.l.b16 %v913
          %v953 = vpack.c.b16 %v938, %v937
          %v954 = vpack.c.b16 %v940, %v939
          %v955 = vpack.c.b16 %v942, %v941
          %v956 = vpack.c.b16 %v944, %v943
          %v957 = vpack.c.b16 %v946, %v945
          %v958 = vpack.c.b16 %v948, %v947
          %v959 = vpack.c.b16 %v950, %v949
          %v960 = vpack.c.b16 %v952, %v951
          %969 = vmatprep.subr.bf16.mxu0 0
          %970 = vmatpush1.bf16.msra.mxu0 %v953
          %971 = vmatprep.subr.bf16.mxu0 0
          %972 = vmatpush1.bf16.msra.mxu0 %v954
          %973 = vmatprep.subr.bf16.mxu0 0
          %974 = vmatpush1.bf16.msra.mxu0 %v955
          %975 = vmatprep.subr.bf16.mxu0 0
          %976 = vmatpush1.bf16.msra.mxu0 %v956
          %977 = vmatprep.subr.bf16.mxu0 0
          %978 = vmatpush1.bf16.msra.mxu0 %v957
          %979 = vmatprep.subr.bf16.mxu0 0
          %980 = vmatpush1.bf16.msra.mxu0 %v958
          %981 = vmatprep.subr.bf16.mxu0 0
          %982 = vmatpush1.bf16.msra.mxu0 %v959
          %983 = vmatprep.subr.bf16.mxu0 0
          %984 = vmatpush1.bf16.msra.mxu0 %v960
          %985 = vmatprep.subr.bf16.mxu0 0
          %986 = vmatpush1.bf16.msra.mxu0 0
          %987 = vmatprep.subr.bf16.mxu0 0
          %988 = vmatpush1.bf16.msra.mxu0 0
          %989 = vmatprep.subr.bf16.mxu0 0
          %990 = vmatpush1.bf16.msra.mxu0 0
          %991 = vmatprep.subr.bf16.mxu0 0
          %992 = vmatpush1.bf16.msra.mxu0 0
          %993 = vmatprep.subr.bf16.mxu0 0
          %994 = vmatpush1.bf16.msra.mxu0 0
          %995 = vmatprep.subr.bf16.mxu0 0
          %996 = vmatpush1.bf16.msra.mxu0 0
          %997 = vmatprep.subr.bf16.mxu0 0
          %998 = vmatpush1.bf16.msra.mxu0 0
          %999 = vmatprep.subr.bf16.mxu0 0
          %1000 = vmatpush1.bf16.msra.mxu0 0
          %1001 = vmatprep.mubr.bf16.mxu0 0
          %1002 = vmatmul.mubr.bf16.gmra.mrb[0].mxu0 %v890
          %v1003 = vpop.f32.mrb[0].mxu0
          %v1004 = vadd.f32 %v919, %v1003
          %v1005 = vpop.f32.mrb[0].mxu0
          %v1006 = vpop.f32.mrb[0].mxu0
          %v1007 = vadd.f32 %v919, %v1006
          %v1008 = vpop.f32.mrb[0].mxu0
          %1009 = vmatprep.mubr.bf16.mxu0 0
          %1010 = vmatmul.mubr.bf16.gmra.mrb[0].mxu0 %v891
          %v1011 = vpop.f32.mrb[0].mxu0
          %v1012 = vadd.f32 %v919, %v1011
          %v1013 = vpop.f32.mrb[0].mxu0
          %v1014 = vpop.f32.mrb[0].mxu0
          %v1015 = vadd.f32 %v919, %v1014
          %v1016 = vpop.f32.mrb[0].mxu0
          %1017 = vmatprep.mubr.bf16.mxu0 0
          %1018 = vmatmul.mubr.bf16.gmra.mrb[0].mxu0 %v892
          %v1019 = vpop.f32.mrb[0].mxu0
          %v1020 = vadd.f32 %v919, %v1019
          %v1021 = vpop.f32.mrb[0].mxu0
          %v1022 = vpop.f32.mrb[0].mxu0
          %v1023 = vadd.f32 %v919, %v1022
          %v1024 = vpop.f32.mrb[0].mxu0
          %1025 = vmatprep.mubr.bf16.mxu0 0
          %1026 = vmatmul.mubr.bf16.gmra.mrb[0].mxu0 %v893
          %v1027 = vpop.f32.mrb[0].mxu0
          %v1028 = vadd.f32 %v919, %v1027
          %v1029 = vpop.f32.mrb[0].mxu0
          %v1030 = vpop.f32.mrb[0].mxu0
          %v1031 = vadd.f32 %v919, %v1030
          %v1032 = vpop.f32.mrb[0].mxu0
          %1033 = vmatprep.mubr.bf16.mxu0 0
          %1034 = vmatmul.mubr.bf16.gmra.mrb[0].mxu0 %v894
          %v1035 = vpop.f32.mrb[0].mxu0
          %v1036 = vadd.f32 %v919, %v1035
          %v1037 = vpop.f32.mrb[0].mxu0
          %v1038 = vpop.f32.mrb[0].mxu0
          %v1039 = vadd.f32 %v919, %v1038
          %v1040 = vpop.f32.mrb[0].mxu0
          %1041 = vmatprep.mubr.bf16.mxu0 0
          %1042 = vmatmul.mubr.bf16.gmra.mrb[0].mxu0 %v895
          %v1043 = vpop.f32.mrb[0].mxu0
          %v1044 = vadd.f32 %v919, %v1043
          %v1045 = vpop.f32.mrb[0].mxu0
          %v1046 = vpop.f32.mrb[0].mxu0
          %v1047 = vadd.f32 %v919, %v1046
          %v1048 = vpop.f32.mrb[0].mxu0
          %1049 = vmatprep.mubr.bf16.mxu0 0
          %1050 = vmatmul.mubr.bf16.gmra.mrb[0].mxu0 %v896
          %v1051 = vpop.f32.mrb[0].mxu0
          %v1052 = vadd.f32 %v919, %v1051
          %v1053 = vpop.f32.mrb[0].mxu0
          %v1054 = vpop.f32.mrb[0].mxu0
          %v1055 = vadd.f32 %v919, %v1054
          %v1056 = vpop.f32.mrb[0].mxu0
          %1057 = vmatprep.mubr.bf16.mxu0 0
          %1058 = vmatmul.mubr.bf16.gmra.mrb[0].mxu0 %v897
          %v1059 = vpop.f32.mrb[0].mxu0
          %v1060 = vadd.f32 %v919, %v1059
          %v1061 = vpop.f32.mrb[0].mxu0
          %v1062 = vpop.f32.mrb[0].mxu0
          %v1063 = vadd.f32 %v919, %v1062
          %v1064 = vpop.f32.mrb[0].mxu0
          %1065 = vdwg.mxu0
          %1066 = vst [vmem:[%s366] sm:$0xff] %v1004
          %1067 = vst [vmem:[%s366 + $0x8] sm:$0xff] %v1007
          %1068 = vst [vmem:[%s366 + $0x10] sm:$0xff] %v1012
          %1069 = vst [vmem:[%s366 + $0x18] sm:$0xff] %v1015
          %1070 = vst [vmem:[%s366 + $0x20] sm:$0xff] %v1020
          %1071 = vst [vmem:[%s366 + $0x28] sm:$0xff] %v1023
          %1072 = vst [vmem:[%s366 + $0x30] sm:$0xff] %v1028
          %1073 = vst [vmem:[%s366 + $0x38] sm:$0xff] %v1031
          %1074 = vst [vmem:[%s366 + $0x40] sm:$0xff] %v1036
          %1075 = vst [vmem:[%s366 + $0x48] sm:$0xff] %v1039
          %1076 = vst [vmem:[%s366 + $0x50] sm:$0xff] %v1044
          %1077 = vst [vmem:[%s366 + $0x58] sm:$0xff] %v1047
          %1078 = vst [vmem:[%s366 + $0x60] sm:$0xff] %v1052
          %1079 = vst [vmem:[%s366 + $0x68] sm:$0xff] %v1055
          %1080 = vst [vmem:[%s366 + $0x70] sm:$0xff] %v1060
          %1081 = vst [vmem:[%s366 + $0x78] sm:$0xff] %v1063
        $region72: #{tpu_custom_call.1} parent=43 // pred_fallthru
          _
        %s1082 = sand.u32 %s183, 1
        %s1083 = scalar_lea.sflag [#allocation5], %s1082
        %s1084 = sand.u32 %s183, 1
        %s1085 = smul.addr %s1084, 128
        %s1086 = scalar_lea.vmem [#allocation12], %s1085
        // Predicated region
        $region73: #{tpu_custom_call.1} parent=43 // pred_check
          %p1087 = pneg %p193
        $region74: #{tpu_custom_call.1} parent=43 // pred_check_branch
          %1089 = sbr.rel (%p1087) target = $region76
        $region75: #{tpu_custom_call.1} parent=43 // pred_region
          %s1090 = smul.u32 16, %s29
          %s1092 = ssub.s32 2048, 2048
          %1093 = vsyncadd %s1083, %s1092
          %s1094 = smul.addr %s1090, 128
          %s1095 = scalar_lea.hbm %s6, %s1094
          %s1096 = sshll.u32 %s1086, 4
          %s1097 = int_to_ptr.vmem [resolvable:$true] %s1096
          %1102 = dma.vmem_to_hbm [thread:$0]  %s1097, 2048, %s1095, %s1083, 128, 128, 8
        $region76: #{tpu_custom_call.1} parent=43 // pred_fallthru
          _
      $region44: #{tpu_custom_call.1} parent=5 // pred_fallthru
        _
      %p1103 = scmp.le.s32.totalorder 2, %s20
      // Predicated region
      $region77: #{tpu_custom_call.1} parent=5 // pred_check
        %p1104 = pneg %p1103
      $region78: #{tpu_custom_call.1} parent=5 // pred_check_branch
        %1106 = sbr.rel (%p1104) target = $region80
      $region79: #{tpu_custom_call.1} parent=5 // pred_region
        %s1107 = ssub.s32 %s20, 2
        // Predicated region
        $region81: #{tpu_custom_call.1} parent=79 // pred_check
          %p1108 = pneg %p199
        $region82: #{tpu_custom_call.1} parent=79 // pred_check_branch
          %1110 = sbr.rel (%p1108) target = $region84
        $region83: #{tpu_custom_call.1} parent=79 // pred_region
          %s1111 = sand.u32 %s184, 1
          %s1112 = scalar_lea.sflag [#allocation5], %s1111
          %s1113 = sand.u32 %s184, 1
          %s1114 = smul.addr %s1113, 128
          %s1115 = scalar_lea.vmem [#allocation12], %s1114
          %1116 = dma.done %s1112, 2048
        $region84: #{tpu_custom_call.1} parent=79 // pred_fallthru
          _
      $region80: #{tpu_custom_call.1} parent=5 // pred_fallthru
        _
    $region6: #{tpu_custom_call.1} parent=1 // loop_footer
      %s24 = sadd.s32 1, %s20
    $region7: #{tpu_custom_call.1} parent=1 // loop_footer_branch
      %19 = sbr.rel target = $region3
    $region8: #{tpu_custom_call.1} parent=1 // loop_exit
      _
    %1117 = vsyncpa [#allocation4], 1
    %s1118 = scalar_lea.sflag [#allocation4], 1
    %1119 = vsyncpa %s1118, 1
    %1120 = vsyncpa [#allocation7], 1
    %1121 = vsyncpa [#allocation11], 1
    %1122 = vsyncpa [#allocation5], 1
    %s1123 = scalar_lea.sflag [#allocation5], 1
    %1124 = vsyncpa %s1123, 1

// kernel: tpu_custom_call.1
$region0: #{tpu_custom_call.1}
  #allocation0 [shape = 'u32[]', space=smem, size = 0x4, offset = 0x4, fixed_abs, tag = 'smem constant byte address 0x4 - core index']
  #allocation1 [shape = 'u32[144,128]{1,0:T(1,128)}', space=vmem, size = 0x12000, scoped, tag = 'internal scratch']
  #allocation2 [shape = 'f32[128,128]{1,0:T(8,128)}', space=vmem, size = 0x10000, scoped, tag = 'scratch operand']
  %s0 = inlined_call_operand.hbm [shape: bf16[384,384], index: 0, kind: input, shape index: {}]
  %s1 = inlined_call_operand.hbm [shape: bf16[384,128], index: 1, kind: input, shape index: {}]
  %s2 = inlined_call_operand.hbm [shape: f32[384,128], index: 2, kind: input, shape index: {}]
  %s3 = inlined_call_operand.hbm [shape: bf16[128,128], index: 3, kind: input, shape index: {}]
  %s4 = inlined_call_operand.hbm [shape: bf16[128,128], index: 4, kind: input, shape index: {}]
  %s5 = inlined_call_operand.vmem [shape: f32[1,128], index: 5, kind: input, shape index: {}]
  %s6 = inlined_call_operand.hbm [shape: f32[384,128], index: 6, kind: output, shape index: {}]
  %s7 = sld [smem:[#allocation0]]
  $region85: #{tpu_custom_call.1} parent=0
    _
  %s9 = ssub.s32 1, %s7
  %s10 = scalar_select 0, %s9, %s7
  $region1: #{tpu_custom_call.1} parent=0
    #allocation3 [shape = 'u8[65536]{0}', space=vmem, size = 0x10000, scoped, tag = 'input window, operand 0']
    #allocation4 [shape = 's32[2]{0}', space=sflag, size = 0x8, scoped, tag = 'scoped memory for tpu_custom_call.1']
    #allocation5 [shape = 's32[2]{0}', space=sflag, size = 0x8, scoped, tag = 'scoped memory for tpu_custom_call.1']
    #allocation6 [shape = 'u8[98304]{0}', space=vmem, size = 0x18000, scoped, tag = 'input window, operand 1, single buffered']
    #allocation7 [shape = 's32[1]{0}', space=sflag, size = 0x4, scoped, tag = 'scoped memory for tpu_custom_call.1']
    #allocation8 [shape = 'u8[131072]{0}', space=vmem, size = 0x20000, scoped, tag = 'input window, operand 2']
    #allocation9 [shape = 'u8[32768]{0}', space=vmem, size = 0x8000, scoped, tag = 'input window, operand 3, single buffered']
    #allocation10 [shape = 'u8[32768]{0}', space=vmem, size = 0x8000, scoped, tag = 'input window, operand 4, single buffered']
    #allocation11 [shape = 's32[1]{0}', space=sflag, size = 0x4, scoped, tag = 'scoped memory for tpu_custom_call.1']
    #allocation12 [shape = 'u8[131072]{0}', space=vmem, size = 0x20000, scoped, tag = 'output window, operand 0']
    %11 = vsyncpa [#allocation4], 0
    %s12 = scalar_lea.sflag [#allocation4], 1
    %13 = vsyncpa %s12, 0
    %14 = vsyncpa [#allocation7], 0
    %15 = vsyncpa [#allocation11], 0
    %16 = vsyncpa [#allocation5], 0
    %s17 = scalar_lea.sflag [#allocation5], 1
    %18 = vsyncpa %s17, 0
    loop: start=0, step=1, limit=11
    $region2: #{tpu_custom_call.1} parent=1 // loop_pre_header
      _
    $region3: #{tpu_custom_call.1} parent=1 // loop_header
      %s20 = sphi 0, %s24
      %p21 = scmp.ge.s32.totalorder %s20, 11
      %s27 = sphi 0, %s39
      %s28 = sphi 0, %s35
      %s29 = sphi 0, %s27
      %s30 = sphi 0, %s28
      %s31 = sphi 0, %s29
      %s32 = sphi 0, %s30
      %s44 = sphi 0, %s46
      %s47 = sphi 0, %s44
      %s48 = sphi 0, %s47
      %s64 = sphi 0, %s48
      %s68 = sphi 0, %s68
      %s70 = sphi 0, %s68
      %s71 = sphi 0, %s70
      %s85 = sphi 0, %s71
      %s91 = sphi 0, %s93
      %s94 = sphi 0, %s91
      %s95 = sphi 0, %s94
      %s111 = sphi 0, %s95
      %s115 = sphi 0, %s115
      %s117 = sphi 0, %s115
      %s118 = sphi 0, %s117
      %s132 = sphi 0, %s118
      %s136 = sphi 0, %s136
      %s138 = sphi 0, %s136
      %s139 = sphi 0, %s138
      %s153 = sphi 0, %s139
      %s157 = sphi 0, %s157
      %s159 = sphi 0, %s157
      %s160 = sphi 0, %s159
      %s174 = sphi 0, %s160
      %s180 = sphi 0, %s182
      %s183 = sphi 0, %s180
      %s184 = sphi 0, %s183
      %s200 = sphi 0, %s184
    $region4: #{tpu_custom_call.1} parent=1 // loop_header_branch
      %23 = sbr.rel (%p21) target = $region8
    $region5: #{tpu_custom_call.1} parent=1 // loop_body
      %s25 = ssub.s32 %s20, 1
      %s26 = ssub.s32 %s20, 2
      %s33 = sadd.s32 1, %s28
      %p34 = scmp.ge.s32.totalorder %s33, 3
      %s35 = scalar_select %p34, 0, %s33
      %s36 = sadd.s32 1, %s27
      %s37 = scalar_select %p34, %s36, %s27
      %p38 = scmp.ge.s32.totalorder %s37, 3
      %s39 = scalar_select %p38, 0, %s37
      %s40 = ssub.s32 %s27, %s39
      %s41 = ssub.s32 %s28, %s35
      %s42 = sor.u32 %s40, %s41
      %p43 = scmp.eq.s32.totalorder %s42, 0
      %s45 = sadd.s32 %s44, 1
      %s46 = scalar_select %p43, %s44, %s45
      %p49 = pneg %p43
      %p50 = scmp.eq.s32.totalorder %s20, 8
      %p51 = por %p49, %p50
      %p52 = scmp.ne.s32.totalorder %s44, %s47
      %p53 = scmp.eq.s32.totalorder %s20, 0
      %p54 = por %p52, %p53
      %p55 = scmp.ne.s32.totalorder %s44, %s47
      %p56 = scmp.eq.s32.totalorder %s25, 8
      %p57 = por %p55, %p56
      %p58 = scmp.ne.s32.totalorder %s47, %s48
      %p59 = scmp.eq.s32.totalorder %s25, 0
      %p60 = por %p58, %p59
      %p61 = scmp.ne.s32.totalorder %s47, %s48
      %p62 = scmp.eq.s32.totalorder %s26, 8
      %p63 = por %p61, %p62
      %p65 = scmp.ne.s32.totalorder %s48, %s64
      %p66 = scmp.eq.s32.totalorder %s26, 0
      %p67 = por %p65, %p66
      %s69 = sadd.s32 %s68, 1
      %p72 = scmp.eq.s32.totalorder %s20, 8
      %p73 = scmp.ne.s32.totalorder %s68, %s70
      %p74 = scmp.eq.s32.totalorder %s20, 0
      %p75 = por %p73, %p74
      %p76 = scmp.ne.s32.totalorder %s68, %s70
      %p77 = scmp.eq.s32.totalorder %s25, 8
      %p78 = por %p76, %p77
      %p79 = scmp.ne.s32.totalorder %s70, %s71
      %p80 = scmp.eq.s32.totalorder %s25, 0
      %p81 = por %p79, %p80
      %p82 = scmp.ne.s32.totalorder %s70, %s71
      %p83 = scmp.eq.s32.totalorder %s26, 8
      %p84 = por %p82, %p83
      %p86 = scmp.ne.s32.totalorder %s71, %s85
      %p87 = scmp.eq.s32.totalorder %s26, 0
      %p88 = por %p86, %p87
      %s89 = ssub.s32 %s27, %s39
      %p90 = scmp.eq.s32.totalorder %s89, 0
      %s92 = sadd.s32 %s91, 1
      %s93 = scalar_select %p90, %s91, %s92
      %p96 = pneg %p90
      %p97 = scmp.eq.s32.totalorder %s20, 8
      %p98 = por %p96, %p97
      %p99 = scmp.ne.s32.totalorder %s91, %s94
      %p100 = scmp.eq.s32.totalorder %s20, 0
      %p101 = por %p99, %p100
      %p102 = scmp.ne.s32.totalorder %s91, %s94
      %p103 = scmp.eq.s32.totalorder %s25, 8
      %p104 = por %p102, %p103
      %p105 = scmp.ne.s32.totalorder %s94, %s95
      %p106 = scmp.eq.s32.totalorder %s25, 0
      %p107 = por %p105, %p106
      %p108 = scmp.ne.s32.totalorder %s94, %s95
      %p109 = scmp.eq.s32.totalorder %s26, 8
      %p110 = por %p108, %p109
      %p112 = scmp.ne.s32.totalorder %s95, %s111
      %p113 = scmp.eq.s32.totalorder %s26, 0
      %p114 = por %p112, %p113
      %s116 = sadd.s32 %s115, 1
      %p119 = scmp.eq.s32.totalorder %s20, 8
      %p120 = scmp.ne.s32.totalorder %s115, %s117
      %p121 = scmp.eq.s32.totalorder %s20, 0
      %p122 = por %p120, %p121
      %p123 = scmp.ne.s32.totalorder %s115, %s117
      %p124 = scmp.eq.s32.totalorder %s25, 8
      %p125 = por %p123, %p124
      %p126 = scmp.ne.s32.totalorder %s117, %s118
      %p127 = scmp.eq.s32.totalorder %s25, 0
      %p128 = por %p126, %p127
      %p129 = scmp.ne.s32.totalorder %s117, %s118
      %p130 = scmp.eq.s32.totalorder %s26, 8
      %p131 = por %p129, %p130
      %p133 = scmp.ne.s32.totalorder %s118, %s132
      %p134 = scmp.eq.s32.totalorder %s26, 0
      %p135 = por %p133, %p134
      %s137 = sadd.s32 %s136, 1
      %p140 = scmp.eq.s32.totalorder %s20, 8
      %p141 = scmp.ne.s32.totalorder %s136, %s138
      %p142 = scmp.eq.s32.totalorder %s20, 0
      %p143 = por %p141, %p142
      %p144 = scmp.ne.s32.totalorder %s136, %s138
      %p145 = scmp.eq.s32.totalorder %s25, 8
      %p146 = por %p144, %p145
      %p147 = scmp.ne.s32.totalorder %s138, %s139
      %p148 = scmp.eq.s32.totalorder %s25, 0
      %p149 = por %p147, %p148
      %p150 = scmp.ne.s32.totalorder %s138, %s139
      %p151 = scmp.eq.s32.totalorder %s26, 8
      %p152 = por %p150, %p151
      %p154 = scmp.ne.s32.totalorder %s139, %s153
      %p155 = scmp.eq.s32.totalorder %s26, 0
      %p156 = por %p154, %p155
      %s158 = sadd.s32 %s157, 1
      %p161 = scmp.eq.s32.totalorder %s20, 8
      %p162 = scmp.ne.s32.totalorder %s157, %s159
      %p163 = scmp.eq.s32.totalorder %s20, 0
      %p164 = por %p162, %p163
      %p165 = scmp.ne.s32.totalorder %s157, %s159
      %p166 = scmp.eq.s32.totalorder %s25, 8
      %p167 = por %p165, %p166
      %p168 = scmp.ne.s32.totalorder %s159, %s160
      %p169 = scmp.eq.s32.totalorder %s25, 0
      %p170 = por %p168, %p169
      %p171 = scmp.ne.s32.totalorder %s159, %s160
      %p172 = scmp.eq.s32.totalorder %s26, 8
      %p173 = por %p171, %p172
      %p175 = scmp.ne.s32.totalorder %s160, %s174
      %p176 = scmp.eq.s32.totalorder %s26, 0
      %p177 = por %p175, %p176
      %s178 = ssub.s32 %s27, %s39
      %p179 = scmp.eq.s32.totalorder %s178, 0
      %s181 = sadd.s32 %s180, 1
      %s182 = scalar_select %p179, %s180, %s181
      %p185 = pneg %p179
      %p186 = scmp.eq.s32.totalorder %s20, 8
      %p187 = por %p185, %p186
      %p188 = scmp.ne.s32.totalorder %s180, %s183
      %p189 = scmp.eq.s32.totalorder %s20, 0
      %p190 = por %p188, %p189
      %p191 = scmp.ne.s32.totalorder %s180, %s183
      %p192 = scmp.eq.s32.totalorder %s25, 8
      %p193 = por %p191, %p192
      %p194 = scmp.ne.s32.totalorder %s183, %s184
      %p195 = scmp.eq.s32.totalorder %s25, 0
      %p196 = por %p194, %p195
      %p197 = scmp.ne.s32.totalorder %s183, %s184
      %p198 = scmp.eq.s32.totalorder %s26, 8
      %p199 = por %p197, %p198
      %p201 = scmp.ne.s32.totalorder %s184, %s200
      %p202 = scmp.eq.s32.totalorder %s26, 0
      %p203 = por %p201, %p202
      %p204 = scmp.le.s32.totalorder 1, %s20
      %p205 = scmp.lt.s32.totalorder %s20, 10
      %p206 = pnand %p204, %p205
      %p207 = pneg %p206
      // Predicated region
      $region9: #{tpu_custom_call.1} parent=5 // pred_check
        _
      $region10: #{tpu_custom_call.1} parent=5 // pred_check_branch
        %209 = sbr.rel (%p206) target = $region12
      $region11: #{tpu_custom_call.1} parent=5 // pred_region
        %s210 = ssub.s32 %s20, 1
        // Predicated region
        $region13: #{tpu_custom_call.1} parent=11 // pred_check
          %p211 = pneg %p81
        $region14: #{tpu_custom_call.1} parent=11 // pred_check_branch
          %213 = sbr.rel (%p211) target = $region16
        $region15: #{tpu_custom_call.1} parent=11 // pred_region
          %s215 = ssub.s32 3072, 3072
          %216 = vsyncadd [#allocation7], %s215
          %s217 = sshll.u32 [#allocation6], 4
          %s218 = int_to_ptr.vmem [resolvable:$true] %s217
          %223 = dma.hbm_to_vmem [thread:$0]  %s1, 3072, %s218, [#allocation7], 64, 64, 4
        $region16: #{tpu_custom_call.1} parent=11 // pred_fallthru
          _
        // Predicated region
        $region17: #{tpu_custom_call.1} parent=11 // pred_check
          %p224 = pneg %p128
        $region18: #{tpu_custom_call.1} parent=11 // pred_check_branch
          %226 = sbr.rel (%p224) target = $region20
        $region19: #{tpu_custom_call.1} parent=11 // pred_region
          %s228 = ssub.s32 1024, 1024
          %229 = vsyncadd [#allocation7], %s228
          %s230 = sshll.u32 [#allocation9], 4
          %s231 = int_to_ptr.vmem [resolvable:$true] %s230
          %236 = dma.hbm_to_vmem [thread:$0]  %s3, 1024, %s231, [#allocation7], 64, 64, 4
        $region20: #{tpu_custom_call.1} parent=11 // pred_fallthru
          _
        // Predicated region
        $region21: #{tpu_custom_call.1} parent=11 // pred_check
          %p237 = pneg %p149
        $region22: #{tpu_custom_call.1} parent=11 // pred_check_branch
          %239 = sbr.rel (%p237) target = $region24
        $region23: #{tpu_custom_call.1} parent=11 // pred_region
          %s241 = ssub.s32 1024, 1024
          %242 = vsyncadd [#allocation11], %s241
          %s243 = sshll.u32 [#allocation10], 4
          %s244 = int_to_ptr.vmem [resolvable:$true] %s243
          %249 = dma.hbm_to_vmem [thread:$0]  %s4, 1024, %s244, [#allocation11], 64, 64, 4
        $region24: #{tpu_custom_call.1} parent=11 // pred_fallthru
          _
        // Predicated region
        $region25: #{tpu_custom_call.1} parent=11 // pred_check
          %p250 = pneg %p170
        $region26: #{tpu_custom_call.1} parent=11 // pred_check_branch
          %252 = sbr.rel (%p250) target = $region28
        $region27: #{tpu_custom_call.1} parent=11 // pred_region
          _
        $region28: #{tpu_custom_call.1} parent=11 // pred_fallthru
          _
      $region12: #{tpu_custom_call.1} parent=5 // pred_fallthru
        _
      %p253 = scmp.lt.s32.totalorder %s20, 9
      // Predicated region
      $region29: #{tpu_custom_call.1} parent=5 // pred_check
        %p254 = pneg %p253
      $region30: #{tpu_custom_call.1} parent=5 // pred_check_branch
        %256 = sbr.rel (%p254) target = $region32
      $region31: #{tpu_custom_call.1} parent=5 // pred_region
        // Predicated region
        $region33: #{tpu_custom_call.1} parent=31 // pred_check
          %p257 = pneg %p54
        $region34: #{tpu_custom_call.1} parent=31 // pred_check_branch
          %259 = sbr.rel (%p257) target = $region36
        $region35: #{tpu_custom_call.1} parent=31 // pred_region
          %s260 = sand.u32 %s20, 1
          %s261 = scalar_lea.sflag [#allocation4], %s260
          %s262 = sand.u32 %s44, 1
          %s263 = smul.addr %s262, 64
          %s264 = scalar_lea.vmem [#allocation3], %s263
          %s265 = smul.u32 16, %s27
          %s267 = ssub.s32 1024, 1024
          %268 = vsyncadd %s261, %s267
          %s269 = smul.addr %s265, 3
          %s270 = sadd.s32 %s28, %s269
          %s271 = smul.addr %s270, 64
          %s272 = scalar_lea.hbm %s0, %s271
          %s273 = sshll.u32 %s264, 4
          %s274 = int_to_ptr.vmem [resolvable:$true] %s273
          %279 = dma.hbm_to_vmem [thread:$0]  %s272, 1024, %s274, %s261, 192, 64, 4
        $region36: #{tpu_custom_call.1} parent=31 // pred_fallthru
          _
        // Predicated region
        $region37: #{tpu_custom_call.1} parent=31 // pred_check
          %p280 = pneg %p101
        $region38: #{tpu_custom_call.1} parent=31 // pred_check_branch
          %282 = sbr.rel (%p280) target = $region40
        $region39: #{tpu_custom_call.1} parent=31 // pred_region
          %s283 = sand.u32 %s20, 1
          %s284 = scalar_lea.sflag [#allocation4], %s283
          %s285 = sand.u32 %s91, 1
          %s286 = smul.addr %s285, 128
          %s287 = scalar_lea.vmem [#allocation8], %s286
          %s288 = smul.u32 16, %s27
          %s290 = ssub.s32 2048, 2048
          %291 = vsyncadd %s284, %s290
          %s292 = smul.addr %s288, 128
          %s293 = scalar_lea.hbm %s2, %s292
          %s294 = sshll.u32 %s287, 4
          %s295 = int_to_ptr.vmem [resolvable:$true] %s294
          %300 = dma.hbm_to_vmem [thread:$0]  %s293, 2048, %s295, %s284, 128, 128, 8
        $region40: #{tpu_custom_call.1} parent=31 // pred_fallthru
          _
      $region32: #{tpu_custom_call.1} parent=5 // pred_fallthru
        _
      %p301 = scmp.le.s32.totalorder 1, %s20
      %p302 = scmp.lt.s32.totalorder %s20, 10
      %p303 = pnand %p301, %p302
      %p304 = pneg %p303
      // Predicated region
      $region41: #{tpu_custom_call.1} parent=5 // pred_check
        _
      $region42: #{tpu_custom_call.1} parent=5 // pred_check_branch
        %306 = sbr.rel (%p303) target = $region44
      $region43: #{tpu_custom_call.1} parent=5 // pred_region
        %s307 = ssub.s32 %s20, 1
        %s308 = sand.u32 %s25, 1
        %s309 = scalar_lea.sflag [#allocation4], %s308
        %s310 = sand.u32 %s47, 1
        %s311 = smul.addr %s310, 64
        %s312 = scalar_lea.vmem [#allocation3], %s311
        // Predicated region
        $region45: #{tpu_custom_call.1} parent=43 // pred_check
          %p313 = pneg %p60
        $region46: #{tpu_custom_call.1} parent=43 // pred_check_branch
          %315 = sbr.rel (%p313) target = $region48
        $region47: #{tpu_custom_call.1} parent=43 // pred_region
          %316 = dma.done %s309, 1024
        $region48: #{tpu_custom_call.1} parent=43 // pred_fallthru
          _
        // Predicated region
        $region49: #{tpu_custom_call.1} parent=43 // pred_check
          %p317 = pneg %p81
        $region50: #{tpu_custom_call.1} parent=43 // pred_check_branch
          %319 = sbr.rel (%p317) target = $region52
        $region51: #{tpu_custom_call.1} parent=43 // pred_region
          %320 = dma.done [#allocation7], 3072
        $region52: #{tpu_custom_call.1} parent=43 // pred_fallthru
          _
        %s321 = sand.u32 %s25, 1
        %s322 = scalar_lea.sflag [#allocation4], %s321
        %s323 = sand.u32 %s94, 1
        %s324 = smul.addr %s323, 128
        %s325 = scalar_lea.vmem [#allocation8], %s324
        // Predicated region
        $region53: #{tpu_custom_call.1} parent=43 // pred_check
          %p326 = pneg %p107
        $region54: #{tpu_custom_call.1} parent=43 // pred_check_branch
          %328 = sbr.rel (%p326) target = $region56
        $region55: #{tpu_custom_call.1} parent=43 // pred_region
          %329 = dma.done %s322, 2048
        $region56: #{tpu_custom_call.1} parent=43 // pred_fallthru
          _
        // Predicated region
        $region57: #{tpu_custom_call.1} parent=43 // pred_check
          %p330 = pneg %p128
        $region58: #{tpu_custom_call.1} parent=43 // pred_check_branch
          %332 = sbr.rel (%p330) target = $region60
        $region59: #{tpu_custom_call.1} parent=43 // pred_region
          %333 = dma.done [#allocation7], 1024
        $region60: #{tpu_custom_call.1} parent=43 // pred_fallthru
          _
        // Predicated region
        $region61: #{tpu_custom_call.1} parent=43 // pred_check
          %p334 = pneg %p149
        $region62: #{tpu_custom_call.1} parent=43 // pred_check_branch
          %336 = sbr.rel (%p334) target = $region64
        $region63: #{tpu_custom_call.1} parent=43 // pred_region
          %337 = dma.done [#allocation11], 1024
        $region64: #{tpu_custom_call.1} parent=43 // pred_fallthru
          _
        %s338 = sand.u32 %s25, 1
        %s339 = scalar_lea.sflag [#allocation4], %s338
        %s340 = sand.u32 %s47, 1
        %s341 = smul.addr %s340, 64
        %s342 = scalar_lea.vmem [#allocation3], %s341
        %p343 = pneg %p60
        %p344 = pneg %p57
        %p345 = pneg %p81
        %p346 = pneg %p78
        %s347 = sand.u32 %s25, 1
        %s348 = scalar_lea.sflag [#allocation4], %s347
        %s349 = sand.u32 %s94, 1
        %s350 = smul.addr %s349, 128
        %s351 = scalar_lea.vmem [#allocation8], %s350
        %p352 = pneg %p107
        %p353 = pneg %p104
        %p354 = pneg %p128
        %p355 = pneg %p125
        %p356 = pneg %p149
        %p357 = pneg %p146
        %p358 = pneg %p170
        %p359 = pneg %p167
        %p360 = pneg %p196
        %p361 = pneg %p193
        %s362 = sand.u32 %s183, 1
        %s363 = scalar_lea.sflag [#allocation5], %s362
        %s364 = sand.u32 %s183, 1
        %s365 = smul.addr %s364, 128
        %s366 = scalar_lea.vmem [#allocation12], %s365
        %s367 = smul.u32 16, %s29
        %s368 = smul.u32 16, %s29
        %s369 = smul.u32 16, %s29
        %p371 = scmp.eq.s32.totalorder %s30, 0
        // Predicated region
        $region65: #{tpu_custom_call.1} parent=43 // pred_check
          %p372 = pneg %p371
        $region66: #{tpu_custom_call.1} parent=43 // pred_check_branch
          %374 = sbr.rel (%p372) target = $region68
        $region67: #{tpu_custom_call.1} parent=43 // pred_region
          %375 = vst [vmem:[#allocation2] sm:$0xff] 0.0
          %376 = vst [vmem:[#allocation2 + $0x8] sm:$0xff] 0.0
          %377 = vst [vmem:[#allocation2 + $0x10] sm:$0xff] 0.0
          %378 = vst [vmem:[#allocation2 + $0x18] sm:$0xff] 0.0
          %379 = vst [vmem:[#allocation2 + $0x20] sm:$0xff] 0.0
          %380 = vst [vmem:[#allocation2 + $0x28] sm:$0xff] 0.0
          %381 = vst [vmem:[#allocation2 + $0x30] sm:$0xff] 0.0
          %382 = vst [vmem:[#allocation2 + $0x38] sm:$0xff] 0.0
          %383 = vst [vmem:[#allocation2 + $0x40] sm:$0xff] 0.0
          %384 = vst [vmem:[#allocation2 + $0x48] sm:$0xff] 0.0
          %385 = vst [vmem:[#allocation2 + $0x50] sm:$0xff] 0.0
          %386 = vst [vmem:[#allocation2 + $0x58] sm:$0xff] 0.0
          %387 = vst [vmem:[#allocation2 + $0x60] sm:$0xff] 0.0
          %388 = vst [vmem:[#allocation2 + $0x68] sm:$0xff] 0.0
          %389 = vst [vmem:[#allocation2 + $0x70] sm:$0xff] 0.0
          %390 = vst [vmem:[#allocation2 + $0x78] sm:$0xff] 0.0
        $region68: #{tpu_custom_call.1} parent=43 // pred_fallthru
          _
        %s391 = smul.u32 %s30, 128
        %s392 = sshra.s32 %s391, 3
        %s393 = sand.u32 %s391, 7
        %s394 = smul.addr %s392, 4
        %s395 = scalar_lea.vmem [#allocation6], %s394
        %v396 = vld [vmem:[%s395] sm:$0xf]
        %v397 = vld [vmem:[%s395 + $0x4] sm:$0xf]
        %v398 = vld [vmem:[%s395 + $0x8] sm:$0xf]
        %v399 = vld [vmem:[%s395 + $0xc] sm:$0xf]
        %v400 = vld [vmem:[%s395 + $0x10] sm:$0xf]
        %v401 = vld [vmem:[%s395 + $0x14] sm:$0xf]
        %v402 = vld [vmem:[%s395 + $0x18] sm:$0xf]
        %v403 = vld [vmem:[%s395 + $0x1c] sm:$0xf]
        %v404 = vld [vmem:[%s395 + $0x20] sm:$0xf]
        %v405 = vld [vmem:[%s395 + $0x24] sm:$0xf]
        %v406 = vld [vmem:[%s395 + $0x28] sm:$0xf]
        %v407 = vld [vmem:[%s395 + $0x2c] sm:$0xf]
        %v408 = vld [vmem:[%s395 + $0x30] sm:$0xf]
        %v409 = vld [vmem:[%s395 + $0x34] sm:$0xf]
        %v410 = vld [vmem:[%s395 + $0x38] sm:$0xf]
        %v411 = vld [vmem:[%s395 + $0x3c] sm:$0xf]
        %v412 = vld [vmem:[#allocation2] sm:$0xff]
        %v413 = vld [vmem:[#allocation2 + $0x8] sm:$0xff]
        %v414 = vld [vmem:[#allocation2 + $0x10] sm:$0xff]
        %v415 = vld [vmem:[#allocation2 + $0x18] sm:$0xff]
        %v416 = vld [vmem:[#allocation2 + $0x20] sm:$0xff]
        %v417 = vld [vmem:[#allocation2 + $0x28] sm:$0xff]
        %v418 = vld [vmem:[#allocation2 + $0x30] sm:$0xff]
        %v419 = vld [vmem:[#allocation2 + $0x38] sm:$0xff]
        %v420 = vld [vmem:[#allocation2 + $0x40] sm:$0xff]
        %v421 = vld [vmem:[#allocation2 + $0x48] sm:$0xff]
        %v422 = vld [vmem:[#allocation2 + $0x50] sm:$0xff]
        %v423 = vld [vmem:[#allocation2 + $0x58] sm:$0xff]
        %v424 = vld [vmem:[#allocation2 + $0x60] sm:$0xff]
        %v425 = vld [vmem:[#allocation2 + $0x68] sm:$0xff]
        %v426 = vld [vmem:[#allocation2 + $0x70] sm:$0xff]
        %v427 = vld [vmem:[#allocation2 + $0x78] sm:$0xff]
        %v428 = vld [vmem:[%s312] sm:$0xf]
        %v429 = vld [vmem:[%s312 + $0x4] sm:$0xf]
        %v430 = vld [vmem:[%s312 + $0x8] sm:$0xf]
        %v431 = vld [vmem:[%s312 + $0xc] sm:$0xf]
        %v432 = vld [vmem:[%s312 + $0x10] sm:$0xf]
        %v433 = vld [vmem:[%s312 + $0x14] sm:$0xf]
        %v434 = vld [vmem:[%s312 + $0x18] sm:$0xf]
        %v435 = vld [vmem:[%s312 + $0x1c] sm:$0xf]
        %v436 = vld [vmem:[%s312 + $0x20] sm:$0xf]
        %v437 = vld [vmem:[%s312 + $0x24] sm:$0xf]
        %v438 = vld [vmem:[%s312 + $0x28] sm:$0xf]
        %v439 = vld [vmem:[%s312 + $0x2c] sm:$0xf]
        %v440 = vld [vmem:[%s312 + $0x30] sm:$0xf]
        %v441 = vld [vmem:[%s312 + $0x34] sm:$0xf]
        %v442 = vld [vmem:[%s312 + $0x38] sm:$0xf]
        %v443 = vld [vmem:[%s312 + $0x3c] sm:$0xf]
        %v460 = vunpack.c.l.b16 %v428
        %v461 = vunpack.c.l.b16 %v429
        %v462 = vunpack.c.l.b16 %v430
        %v463 = vunpack.c.l.b16 %v431
        %v464 = vunpack.c.l.b16 %v432
        %v465 = vunpack.c.l.b16 %v433
        %v466 = vunpack.c.l.b16 %v434
        %v467 = vunpack.c.l.b16 %v435
        %v468 = vunpack.c.l.b16 %v436
        %v469 = vunpack.c.l.b16 %v437
        %v470 = vunpack.c.l.b16 %v438
        %v471 = vunpack.c.l.b16 %v439
        %v472 = vunpack.c.l.b16 %v440
        %v473 = vunpack.c.l.b16 %v441
        %v474 = vunpack.c.l.b16 %v442
        %v475 = vunpack.c.l.b16 %v443
        %v476 = vpack.c.b16 %v461, %v460
        %v477 = vpack.c.b16 %v463, %v462
        %v478 = vpack.c.b16 %v465, %v464
        %v479 = vpack.c.b16 %v467, %v466
        %v480 = vpack.c.b16 %v469, %v468
        %v481 = vpack.c.b16 %v471, %v470
        %v482 = vpack.c.b16 %v473, %v472
        %v483 = vpack.c.b16 %v475, %v474
        %v508 = vunpack.c.l.b16 %v396
        %v509 = vunpack.c.l.b16 %v397
        %v510 = vunpack.c.l.b16 %v398
        %v511 = vunpack.c.l.b16 %v399
        %v512 = vunpack.c.l.b16 %v400
        %v513 = vunpack.c.l.b16 %v401
        %v514 = vunpack.c.l.b16 %v402
        %v515 = vunpack.c.l.b16 %v403
        %v516 = vunpack.c.l.b16 %v404
        %v517 = vunpack.c.l.b16 %v405
        %v518 = vunpack.c.l.b16 %v406
        %v519 = vunpack.c.l.b16 %v407
        %v520 = vunpack.c.l.b16 %v408
        %v521 = vunpack.c.l.b16 %v409
        %v522 = vunpack.c.l.b16 %v410
        %v523 = vunpack.c.l.b16 %v411
        %v524 = vpack.c.b16 %v509, %v508
        %v525 = vpack.c.b16 %v511, %v510
        %v526 = vpack.c.b16 %v513, %v512
        %v527 = vpack.c.b16 %v515, %v514
        %v528 = vpack.c.b16 %v517, %v516
        %v529 = vpack.c.b16 %v519, %v518
        %v530 = vpack.c.b16 %v521, %v520
        %v531 = vpack.c.b16 %v523, %v522
        %540 = vmatprep.subr.bf16.mxu0 0
        %541 = vmatpush1.bf16.msra.mxu0 %v524
        %542 = vmatprep.subr.bf16.mxu0 0
        %543 = vmatpush1.bf16.msra.mxu0 %v525
        %544 = vmatprep.subr.bf16.mxu0 0
        %545 = vmatpush1.bf16.msra.mxu0 %v526
        %546 = vmatprep.subr.bf16.mxu0 0
        %547 = vmatpush1.bf16.msra.mxu0 %v527
        %548 = vmatprep.subr.bf16.mxu0 0
        %549 = vmatpush1.bf16.msra.mxu0 %v528
        %550 = vmatprep.subr.bf16.mxu0 0
        %551 = vmatpush1.bf16.msra.mxu0 %v529
        %552 = vmatprep.subr.bf16.mxu0 0
        %553 = vmatpush1.bf16.msra.mxu0 %v530
        %554 = vmatprep.subr.bf16.mxu0 0
        %555 = vmatpush1.bf16.msra.mxu0 %v531
        %556 = vmatprep.subr.bf16.mxu0 0
        %557 = vmatpush1.bf16.msra.mxu0 0
        %558 = vmatprep.subr.bf16.mxu0 0
        %559 = vmatpush1.bf16.msra.mxu0 0
        %560 = vmatprep.subr.bf16.mxu0 0
        %561 = vmatpush1.bf16.msra.mxu0 0
        %562 = vmatprep.subr.bf16.mxu0 0
        %563 = vmatpush1.bf16.msra.mxu0 0
        %564 = vmatprep.subr.bf16.mxu0 0
        %565 = vmatpush1.bf16.msra.mxu0 0
        %566 = vmatprep.subr.bf16.mxu0 0
        %567 = vmatpush1.bf16.msra.mxu0 0
        %568 = vmatprep.subr.bf16.mxu0 0
        %569 = vmatpush1.bf16.msra.mxu0 0
        %570 = vmatprep.subr.bf16.mxu0 0
        %571 = vmatpush1.bf16.msra.mxu0 0
        %572 = vmatprep.mubr.bf16.mxu0 0
        %573 = vmatmul.mubr.bf16.gmra.mrb[0].mxu0 %v476
        %v574 = vpop.f32.mrb[0].mxu0
        %v575 = vadd.f32 0.0, %v574
        %v576 = vpop.f32.mrb[0].mxu0
        %v577 = vpop.f32.mrb[0].mxu0
        %v578 = vadd.f32 0.0, %v577
        %v579 = vpop.f32.mrb[0].mxu0
        %580 = vmatprep.mubr.bf16.mxu0 0
        %581 = vmatmul.mubr.bf16.gmra.mrb[0].mxu0 %v477
        %v582 = vpop.f32.mrb[0].mxu0
        %v583 = vadd.f32 0.0, %v582
        %v584 = vpop.f32.mrb[0].mxu0
        %v585 = vpop.f32.mrb[0].mxu0
        %v586 = vadd.f32 0.0, %v585
        %v587 = vpop.f32.mrb[0].mxu0
        %588 = vmatprep.mubr.bf16.mxu0 0
        %589 = vmatmul.mubr.bf16.gmra.mrb[0].mxu0 %v478
        %v590 = vpop.f32.mrb[0].mxu0
        %v591 = vadd.f32 0.0, %v590
        %v592 = vpop.f32.mrb[0].mxu0
        %v593 = vpop.f32.mrb[0].mxu0
        %v594 = vadd.f32 0.0, %v593
        %v595 = vpop.f32.mrb[0].mxu0
        %596 = vmatprep.mubr.bf16.mxu0 0
        %597 = vmatmul.mubr.bf16.gmra.mrb[0].mxu0 %v479
        %v598 = vpop.f32.mrb[0].mxu0
        %v599 = vadd.f32 0.0, %v598
        %v600 = vpop.f32.mrb[0].mxu0
        %v601 = vpop.f32.mrb[0].mxu0
        %v602 = vadd.f32 0.0, %v601
        %v603 = vpop.f32.mrb[0].mxu0
        %604 = vmatprep.mubr.bf16.mxu0 0
        %605 = vmatmul.mubr.bf16.gmra.mrb[0].mxu0 %v480
        %v606 = vpop.f32.mrb[0].mxu0
        %v607 = vadd.f32 0.0, %v606
        %v608 = vpop.f32.mrb[0].mxu0
        %v609 = vpop.f32.mrb[0].mxu0
        %v610 = vadd.f32 0.0, %v609
        %v611 = vpop.f32.mrb[0].mxu0
        %612 = vmatprep.mubr.bf16.mxu0 0
        %613 = vmatmul.mubr.bf16.gmra.mrb[0].mxu0 %v481
        %v614 = vpop.f32.mrb[0].mxu0
        %v615 = vadd.f32 0.0, %v614
        %v616 = vpop.f32.mrb[0].mxu0
        %v617 = vpop.f32.mrb[0].mxu0
        %v618 = vadd.f32 0.0, %v617
        %v619 = vpop.f32.mrb[0].mxu0
        %620 = vmatprep.mubr.bf16.mxu0 0
        %621 = vmatmul.mubr.bf16.gmra.mrb[0].mxu0 %v482
        %v622 = vpop.f32.mrb[0].mxu0
        %v623 = vadd.f32 0.0, %v622
        %v624 = vpop.f32.mrb[0].mxu0
        %v625 = vpop.f32.mrb[0].mxu0
        %v626 = vadd.f32 0.0, %v625
        %v627 = vpop.f32.mrb[0].mxu0
        %628 = vmatprep.mubr.bf16.mxu0 0
        %629 = vmatmul.mubr.bf16.gmra.mrb[0].mxu0 %v483
        %v630 = vpop.f32.mrb[0].mxu0
        %v631 = vadd.f32 0.0, %v630
        %v632 = vpop.f32.mrb[0].mxu0
        %v633 = vpop.f32.mrb[0].mxu0
        %v634 = vadd.f32 0.0, %v633
        %v635 = vpop.f32.mrb[0].mxu0
        %636 = vdwg.mxu0
        %v637 = vadd.f32 %v412, %v575
        %v638 = vadd.f32 %v413, %v578
        %v639 = vadd.f32 %v414, %v583
        %v640 = vadd.f32 %v415, %v586
        %v641 = vadd.f32 %v416, %v591
        %v642 = vadd.f32 %v417, %v594
        %v643 = vadd.f32 %v418, %v599
        %v644 = vadd.f32 %v419, %v602
        %v645 = vadd.f32 %v420, %v607
        %v646 = vadd.f32 %v421, %v610
        %v647 = vadd.f32 %v422, %v615
        %v648 = vadd.f32 %v423, %v618
        %v649 = vadd.f32 %v424, %v623
        %v650 = vadd.f32 %v425, %v626
        %v651 = vadd.f32 %v426, %v631
        %v652 = vadd.f32 %v427, %v634
        %653 = vst [vmem:[#allocation2] sm:$0xff] %v637
        %654 = vst [vmem:[#allocation2 + $0x8] sm:$0xff] %v638
        %655 = vst [vmem:[#allocation2 + $0x10] sm:$0xff] %v639
        %656 = vst [vmem:[#allocation2 + $0x18] sm:$0xff] %v640
        %657 = vst [vmem:[#allocation2 + $0x20] sm:$0xff] %v641
        %658 = vst [vmem:[#allocation2 + $0x28] sm:$0xff] %v642
        %659 = vst [vmem:[#allocation2 + $0x30] sm:$0xff] %v643
        %660 = vst [vmem:[#allocation2 + $0x38] sm:$0xff] %v644
        %661 = vst [vmem:[#allocation2 + $0x40] sm:$0xff] %v645
        %662 = vst [vmem:[#allocation2 + $0x48] sm:$0xff] %v646
        %663 = vst [vmem:[#allocation2 + $0x50] sm:$0xff] %v647
        %664 = vst [vmem:[#allocation2 + $0x58] sm:$0xff] %v648
        %665 = vst [vmem:[#allocation2 + $0x60] sm:$0xff] %v649
        %666 = vst [vmem:[#allocation2 + $0x68] sm:$0xff] %v650
        %667 = vst [vmem:[#allocation2 + $0x70] sm:$0xff] %v651
        %668 = vst [vmem:[#allocation2 + $0x78] sm:$0xff] %v652
        %p669 = scmp.eq.s32.totalorder %s30, 2
        // Predicated region
        $region69: #{tpu_custom_call.1} parent=43 // pred_check
          %p670 = pneg %p669
        $region70: #{tpu_custom_call.1} parent=43 // pred_check_branch
          %672 = sbr.rel (%p670) target = $region72
        $region71: #{tpu_custom_call.1} parent=43 // pred_region
          %v673 = vld [vmem:[#allocation2] sm:$0xff]
          %v674 = vld [vmem:[#allocation2 + $0x8] sm:$0xff]
          %v675 = vld [vmem:[#allocation2 + $0x10] sm:$0xff]
          %v676 = vld [vmem:[#allocation2 + $0x18] sm:$0xff]
          %v677 = vld [vmem:[#allocation2 + $0x20] sm:$0xff]
          %v678 = vld [vmem:[#allocation2 + $0x28] sm:$0xff]
          %v679 = vld [vmem:[#allocation2 + $0x30] sm:$0xff]
          %v680 = vld [vmem:[#allocation2 + $0x38] sm:$0xff]
          %v681 = vld [vmem:[#allocation2 + $0x40] sm:$0xff]
          %v682 = vld [vmem:[#allocation2 + $0x48] sm:$0xff]
          %v683 = vld [vmem:[#allocation2 + $0x50] sm:$0xff]
          %v684 = vld [vmem:[#allocation2 + $0x58] sm:$0xff]
          %v685 = vld [vmem:[#allocation2 + $0x60] sm:$0xff]
          %v686 = vld [vmem:[#allocation2 + $0x68] sm:$0xff]
          %v687 = vld [vmem:[#allocation2 + $0x70] sm:$0xff]
          %v688 = vld [vmem:[#allocation2 + $0x78] sm:$0xff]
          %v689 = vpack.c.bf16 %v674, %v673
          %v690 = vpack.c.bf16 %v676, %v675
          %v691 = vpack.c.bf16 %v678, %v677
          %v692 = vpack.c.bf16 %v680, %v679
          %v693 = vpack.c.bf16 %v682, %v681
          %v694 = vpack.c.bf16 %v684, %v683
          %v695 = vpack.c.bf16 %v686, %v685
          %v696 = vpack.c.bf16 %v688, %v687
          %v697 = vld [vmem:[#allocation9] sm:$0xf]
          %v698 = vld [vmem:[#allocation9 + $0x4] sm:$0xf]
          %v699 = vld [vmem:[#allocation9 + $0x8] sm:$0xf]
          %v700 = vld [vmem:[#allocation9 + $0xc] sm:$0xf]
          %v701 = vld [vmem:[#allocation9 + $0x10] sm:$0xf]
          %v702 = vld [vmem:[#allocation9 + $0x14] sm:$0xf]
          %v703 = vld [vmem:[#allocation9 + $0x18] sm:$0xf]
          %v704 = vld [vmem:[#allocation9 + $0x1c] sm:$0xf]
          %v705 = vld [vmem:[#allocation9 + $0x20] sm:$0xf]
          %v706 = vld [vmem:[#allocation9 + $0x24] sm:$0xf]
          %v707 = vld [vmem:[#allocation9 + $0x28] sm:$0xf]
          %v708 = vld [vmem:[#allocation9 + $0x2c] sm:$0xf]
          %v709 = vld [vmem:[#allocation9 + $0x30] sm:$0xf]
          %v710 = vld [vmem:[#allocation9 + $0x34] sm:$0xf]
          %v711 = vld [vmem:[#allocation9 + $0x38] sm:$0xf]
          %v712 = vld [vmem:[#allocation9 + $0x3c] sm:$0xf]
          %v713 = vld [vmem:[%s325] sm:$0xff]
          %v714 = vld [vmem:[%s325 + $0x8] sm:$0xff]
          %v715 = vld [vmem:[%s325 + $0x10] sm:$0xff]
          %v716 = vld [vmem:[%s325 + $0x18] sm:$0xff]
          %v717 = vld [vmem:[%s325 + $0x20] sm:$0xff]
          %v718 = vld [vmem:[%s325 + $0x28] sm:$0xff]
          %v719 = vld [vmem:[%s325 + $0x30] sm:$0xff]
          %v720 = vld [vmem:[%s325 + $0x38] sm:$0xff]
          %v721 = vld [vmem:[%s325 + $0x40] sm:$0xff]
          %v722 = vld [vmem:[%s325 + $0x48] sm:$0xff]
          %v723 = vld [vmem:[%s325 + $0x50] sm:$0xff]
          %v724 = vld [vmem:[%s325 + $0x58] sm:$0xff]
          %v725 = vld [vmem:[%s325 + $0x60] sm:$0xff]
          %v726 = vld [vmem:[%s325 + $0x68] sm:$0xff]
          %v727 = vld [vmem:[%s325 + $0x70] sm:$0xff]
          %v728 = vld [vmem:[%s325 + $0x78] sm:$0xff]
          %v745 = vunpack.c.l.b16 %v697
          %v746 = vunpack.c.l.b16 %v698
          %v747 = vunpack.c.l.b16 %v699
          %v748 = vunpack.c.l.b16 %v700
          %v749 = vunpack.c.l.b16 %v701
          %v750 = vunpack.c.l.b16 %v702
          %v751 = vunpack.c.l.b16 %v703
          %v752 = vunpack.c.l.b16 %v704
          %v753 = vunpack.c.l.b16 %v705
          %v754 = vunpack.c.l.b16 %v706
          %v755 = vunpack.c.l.b16 %v707
          %v756 = vunpack.c.l.b16 %v708
          %v757 = vunpack.c.l.b16 %v709
          %v758 = vunpack.c.l.b16 %v710
          %v759 = vunpack.c.l.b16 %v711
          %v760 = vunpack.c.l.b16 %v712
          %v761 = vpack.c.b16 %v746, %v745
          %v762 = vpack.c.b16 %v748, %v747
          %v763 = vpack.c.b16 %v750, %v749
          %v764 = vpack.c.b16 %v752, %v751
          %v765 = vpack.c.b16 %v754, %v753
          %v766 = vpack.c.b16 %v756, %v755
          %v767 = vpack.c.b16 %v758, %v757
          %v768 = vpack.c.b16 %v760, %v759
          %777 = vmatprep.subr.bf16.mxu0 0
          %778 = vmatpush1.bf16.msra.mxu0 %v761
          %779 = vmatprep.subr.bf16.mxu0 0
          %780 = vmatpush1.bf16.msra.mxu0 %v762
          %781 = vmatprep.subr.bf16.mxu0 0
          %782 = vmatpush1.bf16.msra.mxu0 %v763
          %783 = vmatprep.subr.bf16.mxu0 0
          %784 = vmatpush1.bf16.msra.mxu0 %v764
          %785 = vmatprep.subr.bf16.mxu0 0
          %786 = vmatpush1.bf16.msra.mxu0 %v765
          %787 = vmatprep.subr.bf16.mxu0 0
          %788 = vmatpush1.bf16.msra.mxu0 %v766
          %789 = vmatprep.subr.bf16.mxu0 0
          %790 = vmatpush1.bf16.msra.mxu0 %v767
          %791 = vmatprep.subr.bf16.mxu0 0
          %792 = vmatpush1.bf16.msra.mxu0 %v768
          %793 = vmatprep.subr.bf16.mxu0 0
          %794 = vmatpush1.bf16.msra.mxu0 0
          %795 = vmatprep.subr.bf16.mxu0 0
          %796 = vmatpush1.bf16.msra.mxu0 0
          %797 = vmatprep.subr.bf16.mxu0 0
          %798 = vmatpush1.bf16.msra.mxu0 0
          %799 = vmatprep.subr.bf16.mxu0 0
          %800 = vmatpush1.bf16.msra.mxu0 0
          %801 = vmatprep.subr.bf16.mxu0 0
          %802 = vmatpush1.bf16.msra.mxu0 0
          %803 = vmatprep.subr.bf16.mxu0 0
          %804 = vmatpush1.bf16.msra.mxu0 0
          %805 = vmatprep.subr.bf16.mxu0 0
          %806 = vmatpush1.bf16.msra.mxu0 0
          %807 = vmatprep.subr.bf16.mxu0 0
          %808 = vmatpush1.bf16.msra.mxu0 0
          %809 = vmatprep.mubr.bf16.mxu0 0
          %810 = vmatmul.mubr.bf16.gmra.mrb[0].mxu0 %v689
          %v811 = vpop.f32.mrb[0].mxu0
          %v812 = vadd.f32 %v713, %v811
          %v813 = vpop.f32.mrb[0].mxu0
          %v814 = vpop.f32.mrb[0].mxu0
          %v815 = vadd.f32 %v714, %v814
          %v816 = vpop.f32.mrb[0].mxu0
          %817 = vmatprep.mubr.bf16.mxu0 0
          %818 = vmatmul.mubr.bf16.gmra.mrb[0].mxu0 %v690
          %v819 = vpop.f32.mrb[0].mxu0
          %v820 = vadd.f32 %v715, %v819
          %v821 = vpop.f32.mrb[0].mxu0
          %v822 = vpop.f32.mrb[0].mxu0
          %v823 = vadd.f32 %v716, %v822
          %v824 = vpop.f32.mrb[0].mxu0
          %825 = vmatprep.mubr.bf16.mxu0 0
          %826 = vmatmul.mubr.bf16.gmra.mrb[0].mxu0 %v691
          %v827 = vpop.f32.mrb[0].mxu0
          %v828 = vadd.f32 %v717, %v827
          %v829 = vpop.f32.mrb[0].mxu0
          %v830 = vpop.f32.mrb[0].mxu0
          %v831 = vadd.f32 %v718, %v830
          %v832 = vpop.f32.mrb[0].mxu0
          %833 = vmatprep.mubr.bf16.mxu0 0
          %834 = vmatmul.mubr.bf16.gmra.mrb[0].mxu0 %v692
          %v835 = vpop.f32.mrb[0].mxu0
          %v836 = vadd.f32 %v719, %v835
          %v837 = vpop.f32.mrb[0].mxu0
          %v838 = vpop.f32.mrb[0].mxu0
          %v839 = vadd.f32 %v720, %v838
          %v840 = vpop.f32.mrb[0].mxu0
          %841 = vmatprep.mubr.bf16.mxu0 0
          %842 = vmatmul.mubr.bf16.gmra.mrb[0].mxu0 %v693
          %v843 = vpop.f32.mrb[0].mxu0
          %v844 = vadd.f32 %v721, %v843
          %v845 = vpop.f32.mrb[0].mxu0
          %v846 = vpop.f32.mrb[0].mxu0
          %v847 = vadd.f32 %v722, %v846
          %v848 = vpop.f32.mrb[0].mxu0
          %849 = vmatprep.mubr.bf16.mxu0 0
          %850 = vmatmul.mubr.bf16.gmra.mrb[0].mxu0 %v694
          %v851 = vpop.f32.mrb[0].mxu0
          %v852 = vadd.f32 %v723, %v851
          %v853 = vpop.f32.mrb[0].mxu0
          %v854 = vpop.f32.mrb[0].mxu0
          %v855 = vadd.f32 %v724, %v854
          %v856 = vpop.f32.mrb[0].mxu0
          %857 = vmatprep.mubr.bf16.mxu0 0
          %858 = vmatmul.mubr.bf16.gmra.mrb[0].mxu0 %v695
          %v859 = vpop.f32.mrb[0].mxu0
          %v860 = vadd.f32 %v725, %v859
          %v861 = vpop.f32.mrb[0].mxu0
          %v862 = vpop.f32.mrb[0].mxu0
          %v863 = vadd.f32 %v726, %v862
          %v864 = vpop.f32.mrb[0].mxu0
          %865 = vmatprep.mubr.bf16.mxu0 0
          %866 = vmatmul.mubr.bf16.gmra.mrb[0].mxu0 %v696
          %v867 = vpop.f32.mrb[0].mxu0
          %v868 = vadd.f32 %v727, %v867
          %v869 = vpop.f32.mrb[0].mxu0
          %v870 = vpop.f32.mrb[0].mxu0
          %v871 = vadd.f32 %v728, %v870
          %v872 = vpop.f32.mrb[0].mxu0
          %873 = vdwg.mxu0
          %v874 = vmax.f32 %v812, 0.0
          %v875 = vmax.f32 %v815, 0.0
          %v876 = vmax.f32 %v820, 0.0
          %v877 = vmax.f32 %v823, 0.0
          %v878 = vmax.f32 %v828, 0.0
          %v879 = vmax.f32 %v831, 0.0
          %v880 = vmax.f32 %v836, 0.0
          %v881 = vmax.f32 %v839, 0.0
          %v882 = vmax.f32 %v844, 0.0
          %v883 = vmax.f32 %v847, 0.0
          %v884 = vmax.f32 %v852, 0.0
          %v885 = vmax.f32 %v855, 0.0
          %v886 = vmax.f32 %v860, 0.0
          %v887 = vmax.f32 %v863, 0.0
          %v888 = vmax.f32 %v868, 0.0
          %v889 = vmax.f32 %v871, 0.0
          %v890 = vpack.c.bf16 %v875, %v874
          %v891 = vpack.c.bf16 %v877, %v876
          %v892 = vpack.c.bf16 %v879, %v878
          %v893 = vpack.c.bf16 %v881, %v880
          %v894 = vpack.c.bf16 %v883, %v882
          %v895 = vpack.c.bf16 %v885, %v884
          %v896 = vpack.c.bf16 %v887, %v886
          %v897 = vpack.c.bf16 %v889, %v888
          %v898 = vld [vmem:[#allocation10] sm:$0xf]
          %v899 = vld [vmem:[#allocation10 + $0x4] sm:$0xf]
          %v900 = vld [vmem:[#allocation10 + $0x8] sm:$0xf]
          %v901 = vld [vmem:[#allocation10 + $0xc] sm:$0xf]
          %v902 = vld [vmem:[#allocation10 + $0x10] sm:$0xf]
          %v903 = vld [vmem:[#allocation10 + $0x14] sm:$0xf]
          %v904 = vld [vmem:[#allocation10 + $0x18] sm:$0xf]
          %v905 = vld [vmem:[#allocation10 + $0x1c] sm:$0xf]
          %v906 = vld [vmem:[#allocation10 + $0x20] sm:$0xf]
          %v907 = vld [vmem:[#allocation10 + $0x24] sm:$0xf]
          %v908 = vld [vmem:[#allocation10 + $0x28] sm:$0xf]
          %v909 = vld [vmem:[#allocation10 + $0x2c] sm:$0xf]
          %v910 = vld [vmem:[#allocation10 + $0x30] sm:$0xf]
          %v911 = vld [vmem:[#allocation10 + $0x34] sm:$0xf]
          %v912 = vld [vmem:[#allocation10 + $0x38] sm:$0xf]
          %v913 = vld [vmem:[#allocation10 + $0x3c] sm:$0xf]
          %v914 = vld [vmem:[%s5] sm:$0x1]
          %v916 = vlaneseq
          %v917 = vshrl.u32 %v916, 7
          %v918 = vsub.s32 0, %v917
          %v919 = vrot.slane %v914, %v918
          %v937 = vunpack.c.l.b16 %v898
          %v938 = vunpack.c.l.b16 %v899
          %v939 = vunpack.c.l.b16 %v900
          %v940 = vunpack.c.l.b16 %v901
          %v941 = vunpack.c.l.b16 %v902
          %v942 = vunpack.c.l.b16 %v903
          %v943 = vunpack.c.l.b16 %v904
          %v944 = vunpack.c.l.b16 %v905
          %v945 = vunpack.c.l.b16 %v906
          %v946 = vunpack.c.l.b16 %v907
          %v947 = vunpack.c.l.b16 %v908
          %v948 = vunpack.c.l.b16 %v909
          %v949 = vunpack.c.l.b16 %v910
          %v950 = vunpack.c.l.b16 %v911
          %v951 = vunpack.c.l.b16 %v912
          %v952 = vunpack.c.l.b16 %v913
          %v953 = vpack.c.b16 %v938, %v937
          %v954 = vpack.c.b16 %v940, %v939
          %v955 = vpack.c.b16 %v942, %v941
          %v956 = vpack.c.b16 %v944, %v943
          %v957 = vpack.c.b16 %v946, %v945
          %v958 = vpack.c.b16 %v948, %v947
          %v959 = vpack.c.b16 %v950, %v949
          %v960 = vpack.c.b16 %v952, %v951
          %969 = vmatprep.subr.bf16.mxu0 0
          %970 = vmatpush1.bf16.msra.mxu0 %v953
          %971 = vmatprep.subr.bf16.mxu0 0
          %972 = vmatpush1.bf16.msra.mxu0 %v954
          %973 = vmatprep.subr.bf16.mxu0 0
          %974 = vmatpush1.bf16.msra.mxu0 %v955
          %975 = vmatprep.subr.bf16.mxu0 0
          %976 = vmatpush1.bf16.msra.mxu0 %v956
          %977 = vmatprep.subr.bf16.mxu0 0
          %978 = vmatpush1.bf16.msra.mxu0 %v957
          %979 = vmatprep.subr.bf16.mxu0 0
          %980 = vmatpush1.bf16.msra.mxu0 %v958
          %981 = vmatprep.subr.bf16.mxu0 0
          %982 = vmatpush1.bf16.msra.mxu0 %v959
          %983 = vmatprep.subr.bf16.mxu0 0
          %984 = vmatpush1.bf16.msra.mxu0 %v960
          %985 = vmatprep.subr.bf16.mxu0 0
          %986 = vmatpush1.bf16.msra.mxu0 0
          %987 = vmatprep.subr.bf16.mxu0 0
          %988 = vmatpush1.bf16.msra.mxu0 0
          %989 = vmatprep.subr.bf16.mxu0 0
          %990 = vmatpush1.bf16.msra.mxu0 0
          %991 = vmatprep.subr.bf16.mxu0 0
          %992 = vmatpush1.bf16.msra.mxu0 0
          %993 = vmatprep.subr.bf16.mxu0 0
          %994 = vmatpush1.bf16.msra.mxu0 0
          %995 = vmatprep.subr.bf16.mxu0 0
          %996 = vmatpush1.bf16.msra.mxu0 0
          %997 = vmatprep.subr.bf16.mxu0 0
          %998 = vmatpush1.bf16.msra.mxu0 0
          %999 = vmatprep.subr.bf16.mxu0 0
          %1000 = vmatpush1.bf16.msra.mxu0 0
          %1001 = vmatprep.mubr.bf16.mxu0 0
          %1002 = vmatmul.mubr.bf16.gmra.mrb[0].mxu0 %v890
          %v1003 = vpop.f32.mrb[0].mxu0
          %v1004 = vadd.f32 %v919, %v1003
          %v1005 = vpop.f32.mrb[0].mxu0
          %v1006 = vpop.f32.mrb[0].mxu0
          %v1007 = vadd.f32 %v919, %v1006
          %v1008 = vpop.f32.mrb[0].mxu0
          %1009 = vmatprep.mubr.bf16.mxu0 0
          %1010 = vmatmul.mubr.bf16.gmra.mrb[0].mxu0 %v891
          %v1011 = vpop.f32.mrb[0].mxu0
          %v1012 = vadd.f32 %v919, %v1011
          %v1013 = vpop.f32.mrb[0].mxu0
          %v1014 = vpop.f32.mrb[0].mxu0
          %v1015 = vadd.f32 %v919, %v1014
          %v1016 = vpop.f32.mrb[0].mxu0
          %1017 = vmatprep.mubr.bf16.mxu0 0
          %1018 = vmatmul.mubr.bf16.gmra.mrb[0].mxu0 %v892
          %v1019 = vpop.f32.mrb[0].mxu0
          %v1020 = vadd.f32 %v919, %v1019
          %v1021 = vpop.f32.mrb[0].mxu0
          %v1022 = vpop.f32.mrb[0].mxu0
          %v1023 = vadd.f32 %v919, %v1022
          %v1024 = vpop.f32.mrb[0].mxu0
          %1025 = vmatprep.mubr.bf16.mxu0 0
          %1026 = vmatmul.mubr.bf16.gmra.mrb[0].mxu0 %v893
          %v1027 = vpop.f32.mrb[0].mxu0
          %v1028 = vadd.f32 %v919, %v1027
          %v1029 = vpop.f32.mrb[0].mxu0
          %v1030 = vpop.f32.mrb[0].mxu0
          %v1031 = vadd.f32 %v919, %v1030
          %v1032 = vpop.f32.mrb[0].mxu0
          %1033 = vmatprep.mubr.bf16.mxu0 0
          %1034 = vmatmul.mubr.bf16.gmra.mrb[0].mxu0 %v894
          %v1035 = vpop.f32.mrb[0].mxu0
          %v1036 = vadd.f32 %v919, %v1035
          %v1037 = vpop.f32.mrb[0].mxu0
          %v1038 = vpop.f32.mrb[0].mxu0
          %v1039 = vadd.f32 %v919, %v1038
          %v1040 = vpop.f32.mrb[0].mxu0
          %1041 = vmatprep.mubr.bf16.mxu0 0
          %1042 = vmatmul.mubr.bf16.gmra.mrb[0].mxu0 %v895
          %v1043 = vpop.f32.mrb[0].mxu0
          %v1044 = vadd.f32 %v919, %v1043
          %v1045 = vpop.f32.mrb[0].mxu0
          %v1046 = vpop.f32.mrb[0].mxu0
          %v1047 = vadd.f32 %v919, %v1046
          %v1048 = vpop.f32.mrb[0].mxu0
          %1049 = vmatprep.mubr.bf16.mxu0 0
          %1050 = vmatmul.mubr.bf16.gmra.mrb[0].mxu0 %v896
          %v1051 = vpop.f32.mrb[0].mxu0
          %v1052 = vadd.f32 %v919, %v1051
          %v1053 = vpop.f32.mrb[0].mxu0
          %v1054 = vpop.f32.mrb[0].mxu0
          %v1055 = vadd.f32 %v919, %v1054
          %v1056 = vpop.f32.mrb[0].mxu0
          %1057 = vmatprep.mubr.bf16.mxu0 0
          %1058 = vmatmul.mubr.bf16.gmra.mrb[0].mxu0 %v897
          %v1059 = vpop.f32.mrb[0].mxu0
          %v1060 = vadd.f32 %v919, %v1059
          %v1061 = vpop.f32.mrb[0].mxu0
          %v1062 = vpop.f32.mrb[0].mxu0
          %v1063 = vadd.f32 %v919, %v1062
          %v1064 = vpop.f32.mrb[0].mxu0
          %1065 = vdwg.mxu0
          %1066 = vst [vmem:[%s366] sm:$0xff] %v1004
          %1067 = vst [vmem:[%s366 + $0x8] sm:$0xff] %v1007
          %1068 = vst [vmem:[%s366 + $0x10] sm:$0xff] %v1012
          %1069 = vst [vmem:[%s366 + $0x18] sm:$0xff] %v1015
          %1070 = vst [vmem:[%s366 + $0x20] sm:$0xff] %v1020
          %1071 = vst [vmem:[%s366 + $0x28] sm:$0xff] %v1023
          %1072 = vst [vmem:[%s366 + $0x30] sm:$0xff] %v1028
          %1073 = vst [vmem:[%s366 + $0x38] sm:$0xff] %v1031
          %1074 = vst [vmem:[%s366 + $0x40] sm:$0xff] %v1036
          %1075 = vst [vmem:[%s366 + $0x48] sm:$0xff] %v1039
          %1076 = vst [vmem:[%s366 + $0x50] sm:$0xff] %v1044
          %1077 = vst [vmem:[%s366 + $0x58] sm:$0xff] %v1047
          %1078 = vst [vmem:[%s366 + $0x60] sm:$0xff] %v1052
          %1079 = vst [vmem:[%s366 + $0x68] sm:$0xff] %v1055
          %1080 = vst [vmem:[%s366 + $0x70] sm:$0xff] %v1060
          %1081 = vst [vmem:[%s366 + $0x78] sm:$0xff] %v1063
        $region72: #{tpu_custom_call.1} parent=43 // pred_fallthru
          _
        %s1082 = sand.u32 %s183, 1
        %s1083 = scalar_lea.sflag [#allocation5], %s1082
        %s1084 = sand.u32 %s183, 1
        %s1085 = smul.addr %s1084, 128
        %s1086 = scalar_lea.vmem [#allocation12], %s1085
        // Predicated region
        $region73: #{tpu_custom_call.1} parent=43 // pred_check
          %p1087 = pneg %p193
        $region74: #{tpu_custom_call.1} parent=43 // pred_check_branch
          %1089 = sbr.rel (%p1087) target = $region76
        $region75: #{tpu_custom_call.1} parent=43 // pred_region
          %s1090 = smul.u32 16, %s29
          %s1092 = ssub.s32 2048, 2048
          %1093 = vsyncadd %s1083, %s1092
          %s1094 = smul.addr %s1090, 128
          %s1095 = scalar_lea.hbm %s6, %s1094
          %s1096 = sshll.u32 %s1086, 4
          %s1097 = int_to_ptr.vmem [resolvable:$true] %s1096
          %1102 = dma.vmem_to_hbm [thread:$0]  %s1097, 2048, %s1095, %s1083, 128, 128, 8
        $region76: #{tpu_custom_call.1} parent=43 // pred_fallthru
          _
      $region44: #{tpu_custom_call.1} parent=5 // pred_fallthru
        _
      %p1103 = scmp.le.s32.totalorder 2, %s20
      // Predicated region
      $region77: #{tpu_custom_call.1} parent=5 // pred_check
        %p1104 = pneg %p1103
      $region78: #{tpu_custom_call.1} parent=5 // pred_check_branch
        %1106 = sbr.rel (%p1104) target = $region80
      $region79: #{tpu_custom_call.1} parent=5 // pred_region
        %s1107 = ssub.s32 %s20, 2
        // Predicated region
        $region81: #{tpu_custom_call.1} parent=79 // pred_check
          %p1108 = pneg %p199
        $region82: #{tpu_custom_call.1} parent=79 // pred_check_branch
          %1110 = sbr.rel (%p1108) target = $region84
        $region83: #{tpu_custom_call.1} parent=79 // pred_region
          %s1111 = sand.u32 %s184, 1
          %s1112 = scalar_lea.sflag [#allocation5], %s1111
          %s1113 = sand.u32 %s184, 1
          %s1114 = smul.addr %s1113, 128
          %s1115 = scalar_lea.vmem [#allocation12], %s1114
          %1116 = dma.done %s1112, 2048
        $region84: #{tpu_custom_call.1} parent=79 // pred_fallthru
          _
      $region80: #{tpu_custom_call.1} parent=5 // pred_fallthru
        _
    $region6: #{tpu_custom_call.1} parent=1 // loop_footer
      %s24 = sadd.s32 1, %s20
    $region7: #{tpu_custom_call.1} parent=1 // loop_footer_branch
      %19 = sbr.rel target = $region3
    $region8: #{tpu_custom_call.1} parent=1 // loop_exit
      _
    %1117 = vsyncpa [#allocation4], 1
    %s1118 = scalar_lea.sflag [#allocation4], 1
    %1119 = vsyncpa %s1118, 1
    %1120 = vsyncpa [#allocation7], 1
    %1121 = vsyncpa [#allocation11], 1
    %1122 = vsyncpa [#allocation5], 1
    %s1123 = scalar_lea.sflag [#allocation5], 1
    %1124 = vsyncpa %s1123, 1

</llo_original>
